<compile_context>
chip_gen: v5e
topology: v5e:2x2
jax: 0.10.0
libtpu: 0.0.40
codegen_flags: <defaults>
</compile_context>

<pallas_src>
import functools
import math

import jax
import jax.numpy as jnp
from jax.experimental import pallas as pl
from jax.experimental.pallas import tpu as pltpu


_SQRT_HALF = 1.0 / math.sqrt(2.0)
_TANH_C0 = math.sqrt(2.0 / math.pi)
_TANH_C1 = 0.044715


def _gelu(x, approximate):
    if approximate:
        # tanh approximation: tanh lowers to the EUP slot (effectively free on
        # v6e/v7x), avoiding the long erf VALU polynomial that binds the VALU
        # slot at small/moderate dim.  Slightly deviates from torch's default.
        inner = _TANH_C0 * (x + _TANH_C1 * x * x * x)
        return 0.5 * x * (1.0 + jnp.tanh(inner))
    # Exact erf: matches torch.nn.GELU() default (approximate='none').
    return 0.5 * x * (1.0 + jax.lax.erf(x * _SQRT_HALF))


def mlp_kernel(x_ref, w1_ref, b1_ref, w2_ref, b2_ref, o_ref, acc_ref, *,
               approximate_gelu):
    k = pl.program_id(1)
    last_k = pl.num_programs(1) - 1

    # dense_1 chunk: [TM, dim](bf16) @ [dim, TK](bf16) -> [TM, TK] f32
    h = jnp.dot(x_ref[...], w1_ref[...], preferred_element_type=jnp.float32)
    h = _gelu(h + b1_ref[...], approximate_gelu)          # bias + GELU in f32

    # dense_2 partial: [TM, TK](bf16) @ [TK, dim](bf16) -> [TM, dim] f32
    partial_out = jnp.dot(h.astype(w2_ref.dtype), w2_ref[...],
                          preferred_element_type=jnp.float32)

    @pl.when(k == 0)
    def _():                      # first k chunk: overwrite (no zero-init pass)
        acc_ref[...] = partial_out

    @pl.when(k > 0)
    def _():                      # later chunks: accumulate
        acc_ref[...] += partial_out

    @pl.when(k == last_k)
    def _():
        # b2 added exactly once; dropout -> identity (eval semantics).
        o_ref[...] = (acc_ref[...] + b2_ref[...]).astype(o_ref.dtype)


def _round_up(x, m):
    return (x + m - 1) // m * m


def _vmem_capacity_bytes(default=64 << 20):
    """Physical VMEM of the attached TPU; conservative 64 MiB (v7x) fallback."""
    try:
        cap = getattr(pltpu.get_tpu_info(), "vmem_capacity_bytes", None)
        if cap:
            return int(cap)
    except Exception:
        pass
    return default


def _choose_tiles(rows16, dim, inter, out_itemsize, vmem_budget):
    """Pick (TM, TK, footprint_bytes) fitting the VMEM budget.

    Prefers TK == inter (weights DMA'd once and resident across row tiles);
    otherwise maximizes TM (arithmetic intensity of the weight-streaming loop)
    and shrinks TK until the double-buffered footprint fits.
    """
    def footprint(tm, tk):
        per_step = (tm * dim * 2               # x tile (bf16)
                    + dim * tk * 2             # w1 tile (bf16)
                    + 8 * tk * 4               # b1 chunk (f32, sublane-padded)
                    + tk * dim * 2             # w2 tile (bf16)
                    + 8 * dim * 4              # b2 (f32, sublane-padded)
                    + tm * dim * out_itemsize)  # output tile
        # Pallas double-buffers every BlockSpec operand; plus f32 accumulator.
        return 2 * per_step + tm * dim * 4

    tk_cands = [c for c in range(inter, 127, -128) if inter % c == 0]

    # --- Path 1: whole weight set resident in VMEM (TK == inter). -----------
    # With TK == inter the k grid axis has size 1, so the weight block indices
    # are constant across the grid and Pallas DMAs w1/w2/b1 exactly once.
    if rows16 <= 256:
        resident_tm = [rows16]
    elif rows16 <= 1024:
        resident_tm = [256, 128]       # >=2 row tiles keeps both v7x cores busy
    else:
        resident_tm = [512, 256, 128]
    for tm in resident_tm:
        if footprint(tm, inter) <= vmem_budget:
            return tm, inter, footprint(tm, inter)

    # --- Path 2: weights streamed per row tile.  Arithmetic intensity is ~TM
    # flops per weight byte, so maximize TM first, then shrink TK to fit. ----
    if rows16 <= 256:
        stream_tm = [rows16]
    elif rows16 <= 512:
        stream_tm = [256, 128]
    elif rows16 <= 1024:
        stream_tm = [512, 256, 128]
    else:
        stream_tm = [1024, 512, 256, 128]
    for tm in stream_tm:
        for tk in tk_cands:
            if footprint(tm, tk) <= vmem_budget:
                return tm, tk, footprint(tm, tk)

    # --- Fallback: smallest sensible tiles (huge dim on small-VMEM part). ---
    tm = min(rows16, 128)
    tk = tk_cands[-1] if tk_cands else 128
    return tm, tk, footprint(tm, tk)


def mlp_forward(x, w1, b1, w2, b2, *, approximate_gelu=False):
    """x: [rows, dim]; w1: [dim, 4*dim]; w2: [4*dim, dim] (pre-transposed vs torch)."""
    rows, dim = x.shape
    inter = w1.shape[1]
    assert w1.shape == (dim, inter)
    assert b1.shape == (inter,)
    assert w2.shape == (inter, dim)
    assert b2.shape == (dim,)
    assert dim % 128 == 0, "feature dim must be a multiple of 128"
    assert inter % 128 == 0, "intermediate dim must be a multiple of 128"

    out_dtype = x.dtype
    out_itemsize = jnp.dtype(out_dtype).itemsize

    # --- per-generation VMEM budget ------------------------------------------
    vmem_cap = _vmem_capacity_bytes()
    vmem_budget = min(int(vmem_cap * 0.85), 100 << 20)   # ~54 MiB v7x, 100 MiB v5e/v6e

    rows16 = _round_up(rows, 16)                          # bf16 sublane packing
    TM, TK, footprint = _choose_tiles(rows16, dim, inter, out_itemsize, vmem_budget)
    rows_p = _round_up(rows, TM)
    grid = (rows_p // TM, inter // TK)
    k_steps = grid[1]

    # Never set the limit below what the chosen tiles actually need.
    vmem_limit = int(max(min(footprint + (8 << 20), vmem_budget),
                         footprint + (1 << 20)))

    # --- cost estimate (weights counted once per row tile only when actually
    #     re-streamed; once total when resident) ------------------------------
    weight_passes = 1 if k_steps == 1 else grid[0]
    cost = pl.CostEstimate(
        flops=4 * rows_p * dim * inter,                   # two matmuls
        transcendentals=rows_p * inter,                   # one erf/tanh per hidden element
        bytes_accessed=int(rows_p * dim * 2
                           + weight_passes * 2 * dim * inter * 2
                           + inter * 4 + dim * 4
                           + rows_p * dim * out_itemsize),
    )

    # --- input prep: bf16 matmul operands, f32 biases.  Skip the extra HBM
    #     passes (cast / pad / slice) whenever nothing needs to change. -------
    x_bf = x if x.dtype == jnp.bfloat16 else x.astype(jnp.bfloat16)
    if rows_p != rows:
        x_bf = jnp.pad(x_bf, ((0, rows_p - rows), (0, 0)))
    w1_bf = w1 if w1.dtype == jnp.bfloat16 else w1.astype(jnp.bfloat16)
    w2_bf = w2 if w2.dtype == jnp.bfloat16 else w2.astype(jnp.bfloat16)
    b1_f32 = b1.reshape(1, inter).astype(jnp.float32)
    b2_f32 = b2.reshape(1, dim).astype(jnp.float32)

    grid_spec = pltpu.PrefetchScalarGridSpec(
        num_scalar_prefetch=0,
        grid=grid,
        in_specs=[
            pl.BlockSpec((TM, dim), lambda i, k: (i, 0)),   # x row tile
            pl.BlockSpec((dim, TK), lambda i, k: (0, k)),   # w1 chunk (k only)
            pl.BlockSpec((1, TK), lambda i, k: (0, k)),     # b1 chunk (k only)
            pl.BlockSpec((TK, dim), lambda i, k: (k, 0)),   # w2 chunk (k only)
            pl.BlockSpec((1, dim), lambda i, k: (0, 0)),    # b2 (constant block)
        ],
        out_specs=pl.BlockSpec((TM, dim), lambda i, k: (i, 0)),
        scratch_shapes=[pltpu.VMEM((TM, dim), jnp.float32)],  # f32 accumulator
    )

    out = pl.pallas_call(
        functools.partial(mlp_kernel, approximate_gelu=approximate_gelu),
        out_shape=jax.ShapeDtypeStruct((rows_p, dim), out_dtype),
        grid_spec=grid_spec,
        compiler_params=pltpu.CompilerParams(
            dimension_semantics=("parallel", "arbitrary"),
            vmem_limit_bytes=vmem_limit,
        ),
        cost_estimate=cost,
    )(x_bf, w1_bf, b1_f32, w2_bf, b2_f32)

    return out if rows_p == rows else out[:rows]


def mlp_reference(x, w1, b1, w2, b2):
    h = x @ w1 + b1
    h = 0.5 * h * (1.0 + jax.lax.erf(h * _SQRT_HALF))
    return h @ w2 + b2


if __name__ == "__main__":
    # Module default dim=256, intermediate = 4*dim = 1024, rows = batch*seq = 2*4 = 8.
    dim = 256
    inter = 4 * dim
    batch, seq = 2, 4
    rows = batch * seq

    key = jax.random.PRNGKey(0)
    k_x, k_w1, k_b1, k_w2, k_b2 = jax.random.split(key, 5)

    x = jax.random.normal(k_x, (rows, dim), dtype=jnp.float32)

    # Deterministic init mimicking torch.nn.Linear uniform(-1/sqrt(fan_in), ...).
    bound1 = 1.0 / math.sqrt(dim)
    bound2 = 1.0 / math.sqrt(inter)
    w1 = jax.random.uniform(k_w1, (dim, inter), jnp.float32, -bound1, bound1)
    b1 = jax.random.uniform(k_b1, (inter,), jnp.float32, -bound1, bound1)
    w2 = jax.random.uniform(k_w2, (inter, dim), jnp.float32, -bound2, bound2)
    b2 = jax.random.uniform(k_b2, (dim,), jnp.float32, -bound2, bound2)

    out = mlp_forward(x, w1, b1, w2, b2)
    out = jax.block_until_ready(out)

    ref = mlp_reference(x, w1, b1, w2, b2)
    assert out.shape == (rows, dim)
    # bf16 matmul inputs with f32 accumulation -> relaxed tolerance vs f32 reference.
    assert jnp.allclose(out, ref, atol=2e-2, rtol=2e-2), "mismatch vs reference"

    print("KERNEL_OK")
</pallas_src>

<mosaic_0001>
module attributes {stable_mosaic.version = 11 : i64} {
  func.func @mlp_kernel(%arg0: i32, %arg1: i32, %arg2: memref<16x256xbf16, #tpu.memory_space<vmem>>, %arg3: memref<256x1024xbf16, #tpu.memory_space<vmem>>, %arg4: memref<1x1024xf32, #tpu.memory_space<vmem>>, %arg5: memref<1024x256xbf16, #tpu.memory_space<vmem>>, %arg6: memref<1x256xf32, #tpu.memory_space<vmem>>, %arg7: memref<16x256xf32, #tpu.memory_space<vmem>>, %arg8: memref<16x256xf32, #tpu.memory_space<vmem>>) attributes {dimension_semantics = [#tpu.dimension_semantics<parallel>, #tpu.dimension_semantics<arbitrary>], iteration_bounds = array<i64: 1, 1>, scalar_prefetch = 0 : i64, scratch_operands = 1 : i64, tpu.core_type = #tpu.core_type<tc>, window_params = [{transform_indices = @transform_0, window_bounds = array<i64: 16, 256>}, {transform_indices = @transform_1, window_bounds = array<i64: 256, 1024>}, {transform_indices = @transform_2, window_bounds = array<i64: 1, 1024>}, {transform_indices = @transform_3, window_bounds = array<i64: 1024, 256>}, {pipeline_mode = #tpu.pipeline_mode<synchronous>, transform_indices = @transform_4, window_bounds = array<i64: 1, 256>}, {transform_indices = @transform_5, window_bounds = array<i64: 16, 256>}]} {
    %c0 = arith.constant 0 : index
    %c0_0 = arith.constant 0 : index
    %0 = vector.load %arg2[%c0, %c0_0] : memref<16x256xbf16, #tpu.memory_space<vmem>>, vector<16x256xbf16>
    %c0_1 = arith.constant 0 : index
    %c0_2 = arith.constant 0 : index
    %1 = vector.load %arg3[%c0_1, %c0_2] : memref<256x1024xbf16, #tpu.memory_space<vmem>>, vector<256x1024xbf16>
    %cst = arith.constant dense<0.000000e+00> : vector<16x1024xf32>
    %2 = tpu.matmul %0, %1, %cst {dimension_numbers = #tpu.dot_dimension_numbers<[1], [0], [0], [1], [0, 0, 1, 1], [], []>} : vector<16x256xbf16>, vector<256x1024xbf16>, vector<16x1024xf32> -> vector<16x1024xf32>
    %c0_3 = arith.constant 0 : index
    %c0_4 = arith.constant 0 : index
    %3 = vector.load %arg4[%c0_3, %c0_4] : memref<1x1024xf32, #tpu.memory_space<vmem>>, vector<1x1024xf32>
    %4 = vector.broadcast %3 : vector<1x1024xf32> to vector<16x1024xf32>
    %5 = arith.addf %2, %4 : vector<16x1024xf32>
    %cst_5 = arith.constant 5.000000e-01 : f32
    %6 = vector.broadcast %cst_5 : f32 to vector<16x1024xf32>
    %7 = arith.mulf %6, %5 : vector<16x1024xf32>
    %cst_6 = arith.constant 0.707106769 : f32
    %8 = vector.broadcast %cst_6 : f32 to vector<16x1024xf32>
    %9 = arith.mulf %5, %8 : vector<16x1024xf32>
    %10 = math.erf %9 : vector<16x1024xf32>
    %cst_7 = arith.constant 1.000000e+00 : f32
    %11 = vector.broadcast %cst_7 : f32 to vector<16x1024xf32>
    %12 = arith.addf %11, %10 : vector<16x1024xf32>
    %13 = arith.mulf %7, %12 : vector<16x1024xf32>
    %14 = arith.truncf %13 : vector<16x1024xf32> to vector<16x1024xbf16>
    %c0_8 = arith.constant 0 : index
    %c0_9 = arith.constant 0 : index
    %15 = vector.load %arg5[%c0_8, %c0_9] : memref<1024x256xbf16, #tpu.memory_space<vmem>>, vector<1024x256xbf16>
    %cst_10 = arith.constant dense<0.000000e+00> : vector<16x256xf32>
    %16 = tpu.matmul %14, %15, %cst_10 {dimension_numbers = #tpu.dot_dimension_numbers<[1], [0], [0], [1], [0, 0, 1, 1], [], []>} : vector<16x1024xbf16>, vector<1024x256xbf16>, vector<16x256xf32> -> vector<16x256xf32>
    %c0_i32 = arith.constant 0 : i32
    %17 = arith.cmpi eq, %arg1, %c0_i32 : i32
    %18 = arith.extui %17 : i1 to i32
    %c0_i32_11 = arith.constant 0 : i32
    %19 = arith.cmpi ne, %18, %c0_i32_11 : i32
    scf.if %19 {
      %c0_16 = arith.constant 0 : index
      %c0_17 = arith.constant 0 : index
      %26 = vector.load %arg8[%c0_16, %c0_17] : memref<16x256xf32, #tpu.memory_space<vmem>>, vector<16x256xf32>
      tpu.vector_store %arg8[%c0_16, %c0_17], %16 {strides = array<i32>} : memref<16x256xf32, #tpu.memory_space<vmem>>, vector<16x256xf32>,
    } else {
    }
    %c0_i32_12 = arith.constant 0 : i32
    %20 = arith.cmpi sgt, %arg1, %c0_i32_12 : i32
    %21 = arith.extui %20 : i1 to i32
    %c0_i32_13 = arith.constant 0 : i32
    %22 = arith.cmpi ne, %21, %c0_i32_13 : i32
    scf.if %22 {
      %c0_16 = arith.constant 0 : index
      %c0_17 = arith.constant 0 : index
      %26 = vector.load %arg8[%c0_16, %c0_17] : memref<16x256xf32, #tpu.memory_space<vmem>>, vector<16x256xf32>
      %27 = arith.addf %26, %16 : vector<16x256xf32>
      %c0_18 = arith.constant 0 : index
      %c0_19 = arith.constant 0 : index
      %28 = vector.load %arg8[%c0_18, %c0_19] : memref<16x256xf32, #tpu.memory_space<vmem>>, vector<16x256xf32>
      tpu.vector_store %arg8[%c0_18, %c0_19], %27 {strides = array<i32>} : memref<16x256xf32, #tpu.memory_space<vmem>>, vector<16x256xf32>,
    } else {
    }
    %c0_i32_14 = arith.constant 0 : i32
    %23 = arith.cmpi eq, %arg1, %c0_i32_14 : i32
    %24 = arith.extui %23 : i1 to i32
    %c0_i32_15 = arith.constant 0 : i32
    %25 = arith.cmpi ne, %24, %c0_i32_15 : i32
    scf.if %25 {
      %c0_16 = arith.constant 0 : index
      %c0_17 = arith.constant 0 : index
      %26 = vector.load %arg8[%c0_16, %c0_17] : memref<16x256xf32, #tpu.memory_space<vmem>>, vector<16x256xf32>
      %c0_18 = arith.constant 0 : index
      %c0_19 = arith.constant 0 : index
      %27 = vector.load %arg6[%c0_18, %c0_19] : memref<1x256xf32, #tpu.memory_space<vmem>>, vector<1x256xf32>
      %28 = vector.broadcast %27 : vector<1x256xf32> to vector<16x256xf32>
      %29 = arith.addf %26, %28 : vector<16x256xf32>
      %c0_20 = arith.constant 0 : index
      %c0_21 = arith.constant 0 : index
      %30 = vector.load %arg7[%c0_20, %c0_21] : memref<16x256xf32, #tpu.memory_space<vmem>>, vector<16x256xf32>
      tpu.vector_store %arg7[%c0_20, %c0_21], %29 {strides = array<i32>} : memref<16x256xf32, #tpu.memory_space<vmem>>, vector<16x256xf32>,
    } else {
    }
    return
  }
  func.func @transform_0(%arg0: i32, %arg1: i32) -> (i32, i32) {
    %c0_i32 = arith.constant 0 : i32
    %c0_i32_0 = arith.constant 0 : i32
    return %arg0, %c0_i32 : i32, i32
  }
  func.func @transform_1(%arg0: i32, %arg1: i32) -> (i32, i32) {
    %c0_i32 = arith.constant 0 : i32
    %c0_i32_0 = arith.constant 0 : i32
    return %c0_i32, %arg1 : i32, i32
  }
  func.func @transform_2(%arg0: i32, %arg1: i32) -> (i32, i32) {
    %c0_i32 = arith.constant 0 : i32
    %c0_i32_0 = arith.constant 0 : i32
    return %c0_i32, %arg1 : i32, i32
  }
  func.func @transform_3(%arg0: i32, %arg1: i32) -> (i32, i32) {
    %c0_i32 = arith.constant 0 : i32
    %c0_i32_0 = arith.constant 0 : i32
    return %arg1, %c0_i32 : i32, i32
  }
  func.func @transform_4(%arg0: i32, %arg1: i32) -> (i32, i32) {
    %c0_i32 = arith.constant 0 : i32
    %c0_i32_0 = arith.constant 0 : i32
    %c0_i32_1 = arith.constant 0 : i32
    return %c0_i32, %c0_i32_0 : i32, i32
  }
  func.func @transform_5(%arg0: i32, %arg1: i32) -> (i32, i32) {
    %c0_i32 = arith.constant 0 : i32
    %c0_i32_0 = arith.constant 0 : i32
    return %arg0, %c0_i32 : i32, i32
  }
}

</mosaic_0001>

<llo_original>
// kernel: tpu_custom_call.1
$region0: #{tpu_custom_call.1}
  #allocation0 [shape = 'u32[]', space=smem, size = 0x4, offset = 0x4, fixed_abs, tag = 'smem constant byte address 0x4 - core index']
  #allocation1 [shape = 'u32[72,128]{1,0:T(1,128)}', space=vmem, size = 0x9000, scoped, tag = 'internal scratch']
  #allocation2 [shape = 'f32[16,256]{1,0:T(8,128)}', space=vmem, size = 0x4000, scoped, tag = 'scratch operand']
  %s0 = inlined_call_operand.hbm [shape: bf16[16,256], index: 0, kind: input, shape index: {}]
  %s1 = inlined_call_operand.hbm [shape: bf16[256,1024], index: 1, kind: input, shape index: {}]
  %s2 = inlined_call_operand.hbm [shape: f32[1,1024], index: 2, kind: input, shape index: {}]
  %s3 = inlined_call_operand.hbm [shape: bf16[1024,256], index: 3, kind: input, shape index: {}]
  %s4 = inlined_call_operand.vmem [shape: f32[1,256], index: 4, kind: input, shape index: {}]
  %s5 = inlined_call_operand.hbm [shape: f32[16,256], index: 5, kind: output, shape index: {}]
  %s6 = sld [smem:[#allocation0]]
  $region58: #{tpu_custom_call.1} parent=0
    _
  %s8 = ssub.s32 1, %s6
  %s9 = scalar_select 0, %s8, %s6
  $region1: #{tpu_custom_call.1} parent=0
    #allocation3 [shape = 'u8[8192]{0}', space=vmem, size = 0x2000, scoped, tag = 'input window, operand 0, single buffered']
    #allocation4 [shape = 's32[1]{0}', space=sflag, size = 0x4, scoped, tag = 'scoped memory for tpu_custom_call.1']
    #allocation5 [shape = 's32[1]{0}', space=sflag, size = 0x4, scoped, tag = 'scoped memory for tpu_custom_call.1']
    #allocation6 [shape = 'u8[524288]{0}', space=vmem, size = 0x80000, scoped, tag = 'input window, operand 1, single buffered']
    #allocation7 [shape = 's32[1]{0}', space=sflag, size = 0x4, scoped, tag = 'scoped memory for tpu_custom_call.1']
    #allocation8 [shape = 'u8[4096]{0}', space=vmem, size = 0x1000, scoped, tag = 'input window, operand 2, single buffered']
    #allocation9 [shape = 'u8[524288]{0}', space=vmem, size = 0x80000, scoped, tag = 'input window, operand 3, single buffered']
    #allocation10 [shape = 's32[1]{0}', space=sflag, size = 0x4, scoped, tag = 'scoped memory for tpu_custom_call.1']
    #allocation11 [shape = 'u8[16384]{0}', space=vmem, size = 0x4000, scoped, tag = 'output window, operand 0, single buffered']
    %10 = vsyncpa [#allocation4], 0
    %11 = vsyncpa [#allocation7], 0
    %12 = vsyncpa [#allocation10], 0
    %13 = vsyncpa [#allocation5], 0
    // Predicated region
    $region2: #{tpu_custom_call.1} parent=1 // pred_check
      _
    $region3: #{tpu_custom_call.1} parent=1 // pred_check_branch
      %15 = sbr.rel (0) target = $region5
    $region4: #{tpu_custom_call.1} parent=1 // pred_region
      %17 = vsyncadd [#allocation4], 0
      %s18 = sshll.u32 %s0, 4
      %s19 = int_to_ptr.hbm [resolvable:$true] %s18
      %s20 = sshll.u32 [#allocation3], 4
      %s21 = int_to_ptr.vmem [resolvable:$true] %s20
      %26 = dma.hbm_to_vmem [thread:$0]  %s19, 256, %s21, [#allocation4], 128, 128, 8
    $region5: #{tpu_custom_call.1} parent=1 // pred_fallthru
      _
    // Predicated region
    $region6: #{tpu_custom_call.1} parent=1 // pred_check
      _
    $region7: #{tpu_custom_call.1} parent=1 // pred_check_branch
      %28 = sbr.rel (0) target = $region9
    $region8: #{tpu_custom_call.1} parent=1 // pred_region
      %30 = vsyncadd [#allocation7], 0
      %s31 = sshll.u32 %s1, 4
      %s32 = int_to_ptr.hbm [resolvable:$true] %s31
      %s33 = sshll.u32 [#allocation6], 4
      %s34 = int_to_ptr.vmem [resolvable:$true] %s33
      %39 = dma.hbm_to_vmem [thread:$0]  %s32, 16384, %s34, [#allocation7], 512, 512, 32
    $region9: #{tpu_custom_call.1} parent=1 // pred_fallthru
      _
    // Predicated region
    $region10: #{tpu_custom_call.1} parent=1 // pred_check
      _
    $region11: #{tpu_custom_call.1} parent=1 // pred_check_branch
      %41 = sbr.rel (0) target = $region13
    $region12: #{tpu_custom_call.1} parent=1 // pred_region
      %43 = vsyncadd [#allocation7], 0
      %s45 = sshll.u32 %s2, 4
      %s46 = int_to_ptr.hbm [resolvable:$true] %s45
      %s47 = sshll.u32 [#allocation8], 4
      %s48 = int_to_ptr.vmem [resolvable:$true] %s47
      %50 = dma.hbm_to_vmem [thread:$0]  %s46, 128, %s48, [#allocation7]
    $region13: #{tpu_custom_call.1} parent=1 // pred_fallthru
      _
    // Predicated region
    $region14: #{tpu_custom_call.1} parent=1 // pred_check
      _
    $region15: #{tpu_custom_call.1} parent=1 // pred_check_branch
      %52 = sbr.rel (0) target = $region17
    $region16: #{tpu_custom_call.1} parent=1 // pred_region
      %54 = vsyncadd [#allocation10], 0
      %s55 = sshll.u32 %s3, 4
      %s56 = int_to_ptr.hbm [resolvable:$true] %s55
      %s57 = sshll.u32 [#allocation9], 4
      %s58 = int_to_ptr.vmem [resolvable:$true] %s57
      %63 = dma.hbm_to_vmem [thread:$0]  %s56, 16384, %s58, [#allocation10], 128, 128, 8
    $region17: #{tpu_custom_call.1} parent=1 // pred_fallthru
      _
    // Predicated region
    $region18: #{tpu_custom_call.1} parent=1 // pred_check
      _
    $region19: #{tpu_custom_call.1} parent=1 // pred_check_branch
      %65 = sbr.rel (0) target = $region21
    $region20: #{tpu_custom_call.1} parent=1 // pred_region
      _
    $region21: #{tpu_custom_call.1} parent=1 // pred_fallthru
      _
    // Predicated region
    $region22: #{tpu_custom_call.1} parent=1 // pred_check
      _
    $region23: #{tpu_custom_call.1} parent=1 // pred_check_branch
      %67 = sbr.rel (0) target = $region25
    $region24: #{tpu_custom_call.1} parent=1 // pred_region
      %69 = dma.done [#allocation4], 256
    $region25: #{tpu_custom_call.1} parent=1 // pred_fallthru
      _
    // Predicated region
    $region26: #{tpu_custom_call.1} parent=1 // pred_check
      _
    $region27: #{tpu_custom_call.1} parent=1 // pred_check_branch
      %71 = sbr.rel (0) target = $region29
    $region28: #{tpu_custom_call.1} parent=1 // pred_region
      %73 = dma.done [#allocation7], 16384
    $region29: #{tpu_custom_call.1} parent=1 // pred_fallthru
      _
    // Predicated region
    $region30: #{tpu_custom_call.1} parent=1 // pred_check
      _
    $region31: #{tpu_custom_call.1} parent=1 // pred_check_branch
      %75 = sbr.rel (0) target = $region33
    $region32: #{tpu_custom_call.1} parent=1 // pred_region
      %77 = dma.done [#allocation7], 128
    $region33: #{tpu_custom_call.1} parent=1 // pred_fallthru
      _
    // Predicated region
    $region34: #{tpu_custom_call.1} parent=1 // pred_check
      _
    $region35: #{tpu_custom_call.1} parent=1 // pred_check_branch
      %79 = sbr.rel (0) target = $region37
    $region36: #{tpu_custom_call.1} parent=1 // pred_region
      %81 = dma.done [#allocation10], 16384
    $region37: #{tpu_custom_call.1} parent=1 // pred_fallthru
      _
    %v82 = vld [vmem:[#allocation3] sm:$0xff]
    %v83 = vld [vmem:[#allocation3 + $0x8] sm:$0xff]
    %v84 = vld [vmem:[#allocation6] sm:$0xff]
    %v85 = vld [vmem:[#allocation6 + $0x8] sm:$0xff]
    %v86 = vld [vmem:[#allocation6 + $0x10] sm:$0xff]
    %v87 = vld [vmem:[#allocation6 + $0x18] sm:$0xff]
    %v88 = vld [vmem:[#allocation6 + $0x20] sm:$0xff]
    %v89 = vld [vmem:[#allocation6 + $0x28] sm:$0xff]
    %v90 = vld [vmem:[#allocation6 + $0x30] sm:$0xff]
    %v91 = vld [vmem:[#allocation6 + $0x38] sm:$0xff]
    %v92 = vld [vmem:[#allocation6 + $0x40] sm:$0xff]
    %v93 = vld [vmem:[#allocation6 + $0x48] sm:$0xff]
    %v94 = vld [vmem:[#allocation6 + $0x50] sm:$0xff]
    %v95 = vld [vmem:[#allocation6 + $0x58] sm:$0xff]
    %v96 = vld [vmem:[#allocation6 + $0x60] sm:$0xff]
    %v97 = vld [vmem:[#allocation6 + $0x68] sm:$0xff]
    %v98 = vld [vmem:[#allocation6 + $0x70] sm:$0xff]
    %v99 = vld [vmem:[#allocation6 + $0x78] sm:$0xff]
    %v100 = vld [vmem:[#allocation6 + $0x80] sm:$0xff]
    %v101 = vld [vmem:[#allocation6 + $0x88] sm:$0xff]
    %v102 = vld [vmem:[#allocation6 + $0x90] sm:$0xff]
    %v103 = vld [vmem:[#allocation6 + $0x98] sm:$0xff]
    %v104 = vld [vmem:[#allocation6 + $0xa0] sm:$0xff]
    %v105 = vld [vmem:[#allocation6 + $0xa8] sm:$0xff]
    %v106 = vld [vmem:[#allocation6 + $0xb0] sm:$0xff]
    %v107 = vld [vmem:[#allocation6 + $0xb8] sm:$0xff]
    %v108 = vld [vmem:[#allocation6 + $0xc0] sm:$0xff]
    %v109 = vld [vmem:[#allocation6 + $0xc8] sm:$0xff]
    %v110 = vld [vmem:[#allocation6 + $0xd0] sm:$0xff]
    %v111 = vld [vmem:[#allocation6 + $0xd8] sm:$0xff]
    %v112 = vld [vmem:[#allocation6 + $0xe0] sm:$0xff]
    %v113 = vld [vmem:[#allocation6 + $0xe8] sm:$0xff]
    %v114 = vld [vmem:[#allocation6 + $0xf0] sm:$0xff]
    %v115 = vld [vmem:[#allocation6 + $0xf8] sm:$0xff]
    %v116 = vld [vmem:[#allocation6 + $0x100] sm:$0xff]
    %v117 = vld [vmem:[#allocation6 + $0x108] sm:$0xff]
    %v118 = vld [vmem:[#allocation6 + $0x110] sm:$0xff]
    %v119 = vld [vmem:[#allocation6 + $0x118] sm:$0xff]
    %v120 = vld [vmem:[#allocation6 + $0x120] sm:$0xff]
    %v121 = vld [vmem:[#allocation6 + $0x128] sm:$0xff]
    %v122 = vld [vmem:[#allocation6 + $0x130] sm:$0xff]
    %v123 = vld [vmem:[#allocation6 + $0x138] sm:$0xff]
    %v124 = vld [vmem:[#allocation6 + $0x140] sm:$0xff]
    %v125 = vld [vmem:[#allocation6 + $0x148] sm:$0xff]
    %v126 = vld [vmem:[#allocation6 + $0x150] sm:$0xff]
    %v127 = vld [vmem:[#allocation6 + $0x158] sm:$0xff]
    %v128 = vld [vmem:[#allocation6 + $0x160] sm:$0xff]
    %v129 = vld [vmem:[#allocation6 + $0x168] sm:$0xff]
    %v130 = vld [vmem:[#allocation6 + $0x170] sm:$0xff]
    %v131 = vld [vmem:[#allocation6 + $0x178] sm:$0xff]
    %v132 = vld [vmem:[#allocation6 + $0x180] sm:$0xff]
    %v133 = vld [vmem:[#allocation6 + $0x188] sm:$0xff]
    %v134 = vld [vmem:[#allocation6 + $0x190] sm:$0xff]
    %v135 = vld [vmem:[#allocation6 + $0x198] sm:$0xff]
    %v136 = vld [vmem:[#allocation6 + $0x1a0] sm:$0xff]
    %v137 = vld [vmem:[#allocation6 + $0x1a8] sm:$0xff]
    %v138 = vld [vmem:[#allocation6 + $0x1b0] sm:$0xff]
    %v139 = vld [vmem:[#allocation6 + $0x1b8] sm:$0xff]
    %v140 = vld [vmem:[#allocation6 + $0x1c0] sm:$0xff]
    %v141 = vld [vmem:[#allocation6 + $0x1c8] sm:$0xff]
    %v142 = vld [vmem:[#allocation6 + $0x1d0] sm:$0xff]
    %v143 = vld [vmem:[#allocation6 + $0x1d8] sm:$0xff]
    %v144 = vld [vmem:[#allocation6 + $0x1e0] sm:$0xff]
    %v145 = vld [vmem:[#allocation6 + $0x1e8] sm:$0xff]
    %v146 = vld [vmem:[#allocation6 + $0x1f0] sm:$0xff]
    %v147 = vld [vmem:[#allocation6 + $0x1f8] sm:$0xff]
    %v148 = vld [vmem:[#allocation6 + $0x200] sm:$0xff]
    %v149 = vld [vmem:[#allocation6 + $0x208] sm:$0xff]
    %v150 = vld [vmem:[#allocation6 + $0x210] sm:$0xff]
    %v151 = vld [vmem:[#allocation6 + $0x218] sm:$0xff]
    %v152 = vld [vmem:[#allocation6 + $0x220] sm:$0xff]
    %v153 = vld [vmem:[#allocation6 + $0x228] sm:$0xff]
    %v154 = vld [vmem:[#allocation6 + $0x230] sm:$0xff]
    %v155 = vld [vmem:[#allocation6 + $0x238] sm:$0xff]
    %v156 = vld [vmem:[#allocation6 + $0x240] sm:$0xff]
    %v157 = vld [vmem:[#allocation6 + $0x248] sm:$0xff]
    %v158 = vld [vmem:[#allocation6 + $0x250] sm:$0xff]
    %v159 = vld [vmem:[#allocation6 + $0x258] sm:$0xff]
    %v160 = vld [vmem:[#allocation6 + $0x260] sm:$0xff]
    %v161 = vld [vmem:[#allocation6 + $0x268] sm:$0xff]
    %v162 = vld [vmem:[#allocation6 + $0x270] sm:$0xff]
    %v163 = vld [vmem:[#allocation6 + $0x278] sm:$0xff]
    %v164 = vld [vmem:[#allocation6 + $0x280] sm:$0xff]
    %v165 = vld [vmem:[#allocation6 + $0x288] sm:$0xff]
    %v166 = vld [vmem:[#allocation6 + $0x290] sm:$0xff]
    %v167 = vld [vmem:[#allocation6 + $0x298] sm:$0xff]
    %v168 = vld [vmem:[#allocation6 + $0x2a0] sm:$0xff]
    %v169 = vld [vmem:[#allocation6 + $0x2a8] sm:$0xff]
    %v170 = vld [vmem:[#allocation6 + $0x2b0] sm:$0xff]
    %v171 = vld [vmem:[#allocation6 + $0x2b8] sm:$0xff]
    %v172 = vld [vmem:[#allocation6 + $0x2c0] sm:$0xff]
    %v173 = vld [vmem:[#allocation6 + $0x2c8] sm:$0xff]
    %v174 = vld [vmem:[#allocation6 + $0x2d0] sm:$0xff]
    %v175 = vld [vmem:[#allocation6 + $0x2d8] sm:$0xff]
    %v176 = vld [vmem:[#allocation6 + $0x2e0] sm:$0xff]
    %v177 = vld [vmem:[#allocation6 + $0x2e8] sm:$0xff]
    %v178 = vld [vmem:[#allocation6 + $0x2f0] sm:$0xff]
    %v179 = vld [vmem:[#allocation6 + $0x2f8] sm:$0xff]
    %v180 = vld [vmem:[#allocation6 + $0x300] sm:$0xff]
    %v181 = vld [vmem:[#allocation6 + $0x308] sm:$0xff]
    %v182 = vld [vmem:[#allocation6 + $0x310] sm:$0xff]
    %v183 = vld [vmem:[#allocation6 + $0x318] sm:$0xff]
    %v184 = vld [vmem:[#allocation6 + $0x320] sm:$0xff]
    %v185 = vld [vmem:[#allocation6 + $0x328] sm:$0xff]
    %v186 = vld [vmem:[#allocation6 + $0x330] sm:$0xff]
    %v187 = vld [vmem:[#allocation6 + $0x338] sm:$0xff]
    %v188 = vld [vmem:[#allocation6 + $0x340] sm:$0xff]
    %v189 = vld [vmem:[#allocation6 + $0x348] sm:$0xff]
    %v190 = vld [vmem:[#allocation6 + $0x350] sm:$0xff]
    %v191 = vld [vmem:[#allocation6 + $0x358] sm:$0xff]
    %v192 = vld [vmem:[#allocation6 + $0x360] sm:$0xff]
    %v193 = vld [vmem:[#allocation6 + $0x368] sm:$0xff]
    %v194 = vld [vmem:[#allocation6 + $0x370] sm:$0xff]
    %v195 = vld [vmem:[#allocation6 + $0x378] sm:$0xff]
    %v196 = vld [vmem:[#allocation6 + $0x380] sm:$0xff]
    %v197 = vld [vmem:[#allocation6 + $0x388] sm:$0xff]
    %v198 = vld [vmem:[#allocation6 + $0x390] sm:$0xff]
    %v199 = vld [vmem:[#allocation6 + $0x398] sm:$0xff]
    %v200 = vld [vmem:[#allocation6 + $0x3a0] sm:$0xff]
    %v201 = vld [vmem:[#allocation6 + $0x3a8] sm:$0xff]
    %v202 = vld [vmem:[#allocation6 + $0x3b0] sm:$0xff]
    %v203 = vld [vmem:[#allocation6 + $0x3b8] sm:$0xff]
    %v204 = vld [vmem:[#allocation6 + $0x3c0] sm:$0xff]
    %v205 = vld [vmem:[#allocation6 + $0x3c8] sm:$0xff]
    %v206 = vld [vmem:[#allocation6 + $0x3d0] sm:$0xff]
    %v207 = vld [vmem:[#allocation6 + $0x3d8] sm:$0xff]
    %v208 = vld [vmem:[#allocation6 + $0x3e0] sm:$0xff]
    %v209 = vld [vmem:[#allocation6 + $0x3e8] sm:$0xff]
    %v210 = vld [vmem:[#allocation6 + $0x3f0] sm:$0xff]
    %v211 = vld [vmem:[#allocation6 + $0x3f8] sm:$0xff]
    %v212 = vld [vmem:[#allocation8] sm:$0xff]
    %v214 = vperm.slane %v212, 0
    %v215 = vperm.slane %v212, 1
    %v216 = vperm.slane %v212, 2
    %v217 = vperm.slane %v212, 3
    %v218 = vperm.slane %v212, 4
    %v219 = vperm.slane %v212, 5
    %v220 = vperm.slane %v212, 6
    %v221 = vperm.slane %v212, 7
    %v232 = vunpack.c.l.b16 %v82
    %v233 = vunpack.c.h.b16 %v82
    %v234 = vunpack.c.l.b16 %v83
    %v235 = vunpack.c.h.b16 %v83
    %v236 = vpack.c.b16 %v234, %v232
    %v237 = vpack.c.b16 %v235, %v233
    %v368 = vunpack.c.l.b16 %v84
    %v369 = vunpack.c.h.b16 %v84
    %v370 = vunpack.c.l.b16 %v85
    %v371 = vunpack.c.h.b16 %v85
    %v372 = vunpack.c.l.b16 %v86
    %v373 = vunpack.c.h.b16 %v86
    %v374 = vunpack.c.l.b16 %v87
    %v375 = vunpack.c.h.b16 %v87
    %v376 = vunpack.c.l.b16 %v88
    %v377 = vunpack.c.h.b16 %v88
    %v378 = vunpack.c.l.b16 %v89
    %v379 = vunpack.c.h.b16 %v89
    %v380 = vunpack.c.l.b16 %v90
    %v381 = vunpack.c.h.b16 %v90
    %v382 = vunpack.c.l.b16 %v91
    %v383 = vunpack.c.h.b16 %v91
    %v384 = vunpack.c.l.b16 %v92
    %v385 = vunpack.c.h.b16 %v92
    %v386 = vunpack.c.l.b16 %v93
    %v387 = vunpack.c.h.b16 %v93
    %v388 = vunpack.c.l.b16 %v94
    %v389 = vunpack.c.h.b16 %v94
    %v390 = vunpack.c.l.b16 %v95
    %v391 = vunpack.c.h.b16 %v95
    %v392 = vunpack.c.l.b16 %v96
    %v393 = vunpack.c.h.b16 %v96
    %v394 = vunpack.c.l.b16 %v97
    %v395 = vunpack.c.h.b16 %v97
    %v396 = vunpack.c.l.b16 %v98
    %v397 = vunpack.c.h.b16 %v98
    %v398 = vunpack.c.l.b16 %v99
    %v399 = vunpack.c.h.b16 %v99
    %v400 = vunpack.c.l.b16 %v100
    %v401 = vunpack.c.h.b16 %v100
    %v402 = vunpack.c.l.b16 %v101
    %v403 = vunpack.c.h.b16 %v101
    %v404 = vunpack.c.l.b16 %v102
    %v405 = vunpack.c.h.b16 %v102
    %v406 = vunpack.c.l.b16 %v103
    %v407 = vunpack.c.h.b16 %v103
    %v408 = vunpack.c.l.b16 %v104
    %v409 = vunpack.c.h.b16 %v104
    %v410 = vunpack.c.l.b16 %v105
    %v411 = vunpack.c.h.b16 %v105
    %v412 = vunpack.c.l.b16 %v106
    %v413 = vunpack.c.h.b16 %v106
    %v414 = vunpack.c.l.b16 %v107
    %v415 = vunpack.c.h.b16 %v107
    %v416 = vunpack.c.l.b16 %v108
    %v417 = vunpack.c.h.b16 %v108
    %v418 = vunpack.c.l.b16 %v109
    %v419 = vunpack.c.h.b16 %v109
    %v420 = vunpack.c.l.b16 %v110
    %v421 = vunpack.c.h.b16 %v110
    %v422 = vunpack.c.l.b16 %v111
    %v423 = vunpack.c.h.b16 %v111
    %v424 = vunpack.c.l.b16 %v112
    %v425 = vunpack.c.h.b16 %v112
    %v426 = vunpack.c.l.b16 %v113
    %v427 = vunpack.c.h.b16 %v113
    %v428 = vunpack.c.l.b16 %v114
    %v429 = vunpack.c.h.b16 %v114
    %v430 = vunpack.c.l.b16 %v115
    %v431 = vunpack.c.h.b16 %v115
    %v432 = vunpack.c.l.b16 %v116
    %v433 = vunpack.c.h.b16 %v116
    %v434 = vunpack.c.l.b16 %v117
    %v435 = vunpack.c.h.b16 %v117
    %v436 = vunpack.c.l.b16 %v118
    %v437 = vunpack.c.h.b16 %v118
    %v438 = vunpack.c.l.b16 %v119
    %v439 = vunpack.c.h.b16 %v119
    %v440 = vunpack.c.l.b16 %v120
    %v441 = vunpack.c.h.b16 %v120
    %v442 = vunpack.c.l.b16 %v121
    %v443 = vunpack.c.h.b16 %v121
    %v444 = vunpack.c.l.b16 %v122
    %v445 = vunpack.c.h.b16 %v122
    %v446 = vunpack.c.l.b16 %v123
    %v447 = vunpack.c.h.b16 %v123
    %v448 = vunpack.c.l.b16 %v124
    %v449 = vunpack.c.h.b16 %v124
    %v450 = vunpack.c.l.b16 %v125
    %v451 = vunpack.c.h.b16 %v125
    %v452 = vunpack.c.l.b16 %v126
    %v453 = vunpack.c.h.b16 %v126
    %v454 = vunpack.c.l.b16 %v127
    %v455 = vunpack.c.h.b16 %v127
    %v456 = vunpack.c.l.b16 %v128
    %v457 = vunpack.c.h.b16 %v128
    %v458 = vunpack.c.l.b16 %v129
    %v459 = vunpack.c.h.b16 %v129
    %v460 = vunpack.c.l.b16 %v130
    %v461 = vunpack.c.h.b16 %v130
    %v462 = vunpack.c.l.b16 %v131
    %v463 = vunpack.c.h.b16 %v131
    %v464 = vunpack.c.l.b16 %v132
    %v465 = vunpack.c.h.b16 %v132
    %v466 = vunpack.c.l.b16 %v133
    %v467 = vunpack.c.h.b16 %v133
    %v468 = vunpack.c.l.b16 %v134
    %v469 = vunpack.c.h.b16 %v134
    %v470 = vunpack.c.l.b16 %v135
    %v471 = vunpack.c.h.b16 %v135
    %v472 = vunpack.c.l.b16 %v136
    %v473 = vunpack.c.h.b16 %v136
    %v474 = vunpack.c.l.b16 %v137
    %v475 = vunpack.c.h.b16 %v137
    %v476 = vunpack.c.l.b16 %v138
    %v477 = vunpack.c.h.b16 %v138
    %v478 = vunpack.c.l.b16 %v139
    %v479 = vunpack.c.h.b16 %v139
    %v480 = vunpack.c.l.b16 %v140
    %v481 = vunpack.c.h.b16 %v140
    %v482 = vunpack.c.l.b16 %v141
    %v483 = vunpack.c.h.b16 %v141
    %v484 = vunpack.c.l.b16 %v142
    %v485 = vunpack.c.h.b16 %v142
    %v486 = vunpack.c.l.b16 %v143
    %v487 = vunpack.c.h.b16 %v143
    %v488 = vunpack.c.l.b16 %v144
    %v489 = vunpack.c.h.b16 %v144
    %v490 = vunpack.c.l.b16 %v145
    %v491 = vunpack.c.h.b16 %v145
    %v492 = vunpack.c.l.b16 %v146
    %v493 = vunpack.c.h.b16 %v146
    %v494 = vunpack.c.l.b16 %v147
    %v495 = vunpack.c.h.b16 %v147
    %v496 = vunpack.c.l.b16 %v148
    %v497 = vunpack.c.h.b16 %v148
    %v498 = vunpack.c.l.b16 %v149
    %v499 = vunpack.c.h.b16 %v149
    %v500 = vunpack.c.l.b16 %v150
    %v501 = vunpack.c.h.b16 %v150
    %v502 = vunpack.c.l.b16 %v151
    %v503 = vunpack.c.h.b16 %v151
    %v504 = vunpack.c.l.b16 %v152
    %v505 = vunpack.c.h.b16 %v152
    %v506 = vunpack.c.l.b16 %v153
    %v507 = vunpack.c.h.b16 %v153
    %v508 = vunpack.c.l.b16 %v154
    %v509 = vunpack.c.h.b16 %v154
    %v510 = vunpack.c.l.b16 %v155
    %v511 = vunpack.c.h.b16 %v155
    %v512 = vunpack.c.l.b16 %v156
    %v513 = vunpack.c.h.b16 %v156
    %v514 = vunpack.c.l.b16 %v157
    %v515 = vunpack.c.h.b16 %v157
    %v516 = vunpack.c.l.b16 %v158
    %v517 = vunpack.c.h.b16 %v158
    %v518 = vunpack.c.l.b16 %v159
    %v519 = vunpack.c.h.b16 %v159
    %v520 = vunpack.c.l.b16 %v160
    %v521 = vunpack.c.h.b16 %v160
    %v522 = vunpack.c.l.b16 %v161
    %v523 = vunpack.c.h.b16 %v161
    %v524 = vunpack.c.l.b16 %v162
    %v525 = vunpack.c.h.b16 %v162
    %v526 = vunpack.c.l.b16 %v163
    %v527 = vunpack.c.h.b16 %v163
    %v528 = vunpack.c.l.b16 %v164
    %v529 = vunpack.c.h.b16 %v164
    %v530 = vunpack.c.l.b16 %v165
    %v531 = vunpack.c.h.b16 %v165
    %v532 = vunpack.c.l.b16 %v166
    %v533 = vunpack.c.h.b16 %v166
    %v534 = vunpack.c.l.b16 %v167
    %v535 = vunpack.c.h.b16 %v167
    %v536 = vunpack.c.l.b16 %v168
    %v537 = vunpack.c.h.b16 %v168
    %v538 = vunpack.c.l.b16 %v169
    %v539 = vunpack.c.h.b16 %v169
    %v540 = vunpack.c.l.b16 %v170
    %v541 = vunpack.c.h.b16 %v170
    %v542 = vunpack.c.l.b16 %v171
    %v543 = vunpack.c.h.b16 %v171
    %v544 = vunpack.c.l.b16 %v172
    %v545 = vunpack.c.h.b16 %v172
    %v546 = vunpack.c.l.b16 %v173
    %v547 = vunpack.c.h.b16 %v173
    %v548 = vunpack.c.l.b16 %v174
    %v549 = vunpack.c.h.b16 %v174
    %v550 = vunpack.c.l.b16 %v175
    %v551 = vunpack.c.h.b16 %v175
    %v552 = vunpack.c.l.b16 %v176
    %v553 = vunpack.c.h.b16 %v176
    %v554 = vunpack.c.l.b16 %v177
    %v555 = vunpack.c.h.b16 %v177
    %v556 = vunpack.c.l.b16 %v178
    %v557 = vunpack.c.h.b16 %v178
    %v558 = vunpack.c.l.b16 %v179
    %v559 = vunpack.c.h.b16 %v179
    %v560 = vunpack.c.l.b16 %v180
    %v561 = vunpack.c.h.b16 %v180
    %v562 = vunpack.c.l.b16 %v181
    %v563 = vunpack.c.h.b16 %v181
    %v564 = vunpack.c.l.b16 %v182
    %v565 = vunpack.c.h.b16 %v182
    %v566 = vunpack.c.l.b16 %v183
    %v567 = vunpack.c.h.b16 %v183
    %v568 = vunpack.c.l.b16 %v184
    %v569 = vunpack.c.h.b16 %v184
    %v570 = vunpack.c.l.b16 %v185
    %v571 = vunpack.c.h.b16 %v185
    %v572 = vunpack.c.l.b16 %v186
    %v573 = vunpack.c.h.b16 %v186
    %v574 = vunpack.c.l.b16 %v187
    %v575 = vunpack.c.h.b16 %v187
    %v576 = vunpack.c.l.b16 %v188
    %v577 = vunpack.c.h.b16 %v188
    %v578 = vunpack.c.l.b16 %v189
    %v579 = vunpack.c.h.b16 %v189
    %v580 = vunpack.c.l.b16 %v190
    %v581 = vunpack.c.h.b16 %v190
    %v582 = vunpack.c.l.b16 %v191
    %v583 = vunpack.c.h.b16 %v191
    %v584 = vunpack.c.l.b16 %v192
    %v585 = vunpack.c.h.b16 %v192
    %v586 = vunpack.c.l.b16 %v193
    %v587 = vunpack.c.h.b16 %v193
    %v588 = vunpack.c.l.b16 %v194
    %v589 = vunpack.c.h.b16 %v194
    %v590 = vunpack.c.l.b16 %v195
    %v591 = vunpack.c.h.b16 %v195
    %v592 = vunpack.c.l.b16 %v196
    %v593 = vunpack.c.h.b16 %v196
    %v594 = vunpack.c.l.b16 %v197
    %v595 = vunpack.c.h.b16 %v197
    %v596 = vunpack.c.l.b16 %v198
    %v597 = vunpack.c.h.b16 %v198
    %v598 = vunpack.c.l.b16 %v199
    %v599 = vunpack.c.h.b16 %v199
    %v600 = vunpack.c.l.b16 %v200
    %v601 = vunpack.c.h.b16 %v200
    %v602 = vunpack.c.l.b16 %v201
    %v603 = vunpack.c.h.b16 %v201
    %v604 = vunpack.c.l.b16 %v202
    %v605 = vunpack.c.h.b16 %v202
    %v606 = vunpack.c.l.b16 %v203
    %v607 = vunpack.c.h.b16 %v203
    %v608 = vunpack.c.l.b16 %v204
    %v609 = vunpack.c.h.b16 %v204
    %v610 = vunpack.c.l.b16 %v205
    %v611 = vunpack.c.h.b16 %v205
    %v612 = vunpack.c.l.b16 %v206
    %v613 = vunpack.c.h.b16 %v206
    %v614 = vunpack.c.l.b16 %v207
    %v615 = vunpack.c.h.b16 %v207
    %v616 = vunpack.c.l.b16 %v208
    %v617 = vunpack.c.h.b16 %v208
    %v618 = vunpack.c.l.b16 %v209
    %v619 = vunpack.c.h.b16 %v209
    %v620 = vunpack.c.l.b16 %v210
    %v621 = vunpack.c.h.b16 %v210
    %v622 = vunpack.c.l.b16 %v211
    %v623 = vunpack.c.h.b16 %v211
    %v624 = vpack.c.b16 %v376, %v368
    %v625 = vpack.c.b16 %v377, %v369
    %v626 = vpack.c.b16 %v378, %v370
    %v627 = vpack.c.b16 %v379, %v371
    %v628 = vpack.c.b16 %v380, %v372
    %v629 = vpack.c.b16 %v381, %v373
    %v630 = vpack.c.b16 %v382, %v374
    %v631 = vpack.c.b16 %v383, %v375
    %v632 = vpack.c.b16 %v392, %v384
    %v633 = vpack.c.b16 %v393, %v385
    %v634 = vpack.c.b16 %v394, %v386
    %v635 = vpack.c.b16 %v395, %v387
    %v636 = vpack.c.b16 %v396, %v388
    %v637 = vpack.c.b16 %v397, %v389
    %v638 = vpack.c.b16 %v398, %v390
    %v639 = vpack.c.b16 %v399, %v391
    %v640 = vpack.c.b16 %v408, %v400
    %v641 = vpack.c.b16 %v409, %v401
    %v642 = vpack.c.b16 %v410, %v402
    %v643 = vpack.c.b16 %v411, %v403
    %v644 = vpack.c.b16 %v412, %v404
    %v645 = vpack.c.b16 %v413, %v405
    %v646 = vpack.c.b16 %v414, %v406
    %v647 = vpack.c.b16 %v415, %v407
    %v648 = vpack.c.b16 %v424, %v416
    %v649 = vpack.c.b16 %v425, %v417
    %v650 = vpack.c.b16 %v426, %v418
    %v651 = vpack.c.b16 %v427, %v419
    %v652 = vpack.c.b16 %v428, %v420
    %v653 = vpack.c.b16 %v429, %v421
    %v654 = vpack.c.b16 %v430, %v422
    %v655 = vpack.c.b16 %v431, %v423
    %v656 = vpack.c.b16 %v440, %v432
    %v657 = vpack.c.b16 %v441, %v433
    %v658 = vpack.c.b16 %v442, %v434
    %v659 = vpack.c.b16 %v443, %v435
    %v660 = vpack.c.b16 %v444, %v436
    %v661 = vpack.c.b16 %v445, %v437
    %v662 = vpack.c.b16 %v446, %v438
    %v663 = vpack.c.b16 %v447, %v439
    %v664 = vpack.c.b16 %v456, %v448
    %v665 = vpack.c.b16 %v457, %v449
    %v666 = vpack.c.b16 %v458, %v450
    %v667 = vpack.c.b16 %v459, %v451
    %v668 = vpack.c.b16 %v460, %v452
    %v669 = vpack.c.b16 %v461, %v453
    %v670 = vpack.c.b16 %v462, %v454
    %v671 = vpack.c.b16 %v463, %v455
    %v672 = vpack.c.b16 %v472, %v464
    %v673 = vpack.c.b16 %v473, %v465
    %v674 = vpack.c.b16 %v474, %v466
    %v675 = vpack.c.b16 %v475, %v467
    %v676 = vpack.c.b16 %v476, %v468
    %v677 = vpack.c.b16 %v477, %v469
    %v678 = vpack.c.b16 %v478, %v470
    %v679 = vpack.c.b16 %v479, %v471
    %v680 = vpack.c.b16 %v488, %v480
    %v681 = vpack.c.b16 %v489, %v481
    %v682 = vpack.c.b16 %v490, %v482
    %v683 = vpack.c.b16 %v491, %v483
    %v684 = vpack.c.b16 %v492, %v484
    %v685 = vpack.c.b16 %v493, %v485
    %v686 = vpack.c.b16 %v494, %v486
    %v687 = vpack.c.b16 %v495, %v487
    %v688 = vpack.c.b16 %v504, %v496
    %v689 = vpack.c.b16 %v505, %v497
    %v690 = vpack.c.b16 %v506, %v498
    %v691 = vpack.c.b16 %v507, %v499
    %v692 = vpack.c.b16 %v508, %v500
    %v693 = vpack.c.b16 %v509, %v501
    %v694 = vpack.c.b16 %v510, %v502
    %v695 = vpack.c.b16 %v511, %v503
    %v696 = vpack.c.b16 %v520, %v512
    %v697 = vpack.c.b16 %v521, %v513
    %v698 = vpack.c.b16 %v522, %v514
    %v699 = vpack.c.b16 %v523, %v515
    %v700 = vpack.c.b16 %v524, %v516
    %v701 = vpack.c.b16 %v525, %v517
    %v702 = vpack.c.b16 %v526, %v518
    %v703 = vpack.c.b16 %v527, %v519
    %v704 = vpack.c.b16 %v536, %v528
    %v705 = vpack.c.b16 %v537, %v529
    %v706 = vpack.c.b16 %v538, %v530
    %v707 = vpack.c.b16 %v539, %v531
    %v708 = vpack.c.b16 %v540, %v532
    %v709 = vpack.c.b16 %v541, %v533
    %v710 = vpack.c.b16 %v542, %v534
    %v711 = vpack.c.b16 %v543, %v535
    %v712 = vpack.c.b16 %v552, %v544
    %v713 = vpack.c.b16 %v553, %v545
    %v714 = vpack.c.b16 %v554, %v546
    %v715 = vpack.c.b16 %v555, %v547
    %v716 = vpack.c.b16 %v556, %v548
    %v717 = vpack.c.b16 %v557, %v549
    %v718 = vpack.c.b16 %v558, %v550
    %v719 = vpack.c.b16 %v559, %v551
    %v720 = vpack.c.b16 %v568, %v560
    %v721 = vpack.c.b16 %v569, %v561
    %v722 = vpack.c.b16 %v570, %v562
    %v723 = vpack.c.b16 %v571, %v563
    %v724 = vpack.c.b16 %v572, %v564
    %v725 = vpack.c.b16 %v573, %v565
    %v726 = vpack.c.b16 %v574, %v566
    %v727 = vpack.c.b16 %v575, %v567
    %v728 = vpack.c.b16 %v584, %v576
    %v729 = vpack.c.b16 %v585, %v577
    %v730 = vpack.c.b16 %v586, %v578
    %v731 = vpack.c.b16 %v587, %v579
    %v732 = vpack.c.b16 %v588, %v580
    %v733 = vpack.c.b16 %v589, %v581
    %v734 = vpack.c.b16 %v590, %v582
    %v735 = vpack.c.b16 %v591, %v583
    %v736 = vpack.c.b16 %v600, %v592
    %v737 = vpack.c.b16 %v601, %v593
    %v738 = vpack.c.b16 %v602, %v594
    %v739 = vpack.c.b16 %v603, %v595
    %v740 = vpack.c.b16 %v604, %v596
    %v741 = vpack.c.b16 %v605, %v597
    %v742 = vpack.c.b16 %v606, %v598
    %v743 = vpack.c.b16 %v607, %v599
    %v744 = vpack.c.b16 %v616, %v608
    %v745 = vpack.c.b16 %v617, %v609
    %v746 = vpack.c.b16 %v618, %v610
    %v747 = vpack.c.b16 %v619, %v611
    %v748 = vpack.c.b16 %v620, %v612
    %v749 = vpack.c.b16 %v621, %v613
    %v750 = vpack.c.b16 %v622, %v614
    %v751 = vpack.c.b16 %v623, %v615
    %880 = vmatpush.bf16.msra.mxu0 %v680
    %881 = vmatpush.bf16.msra.mxu0 %v672
    %882 = vmatpush.bf16.msra.mxu0 %v664
    %883 = vmatpush.bf16.msra.mxu0 %v656
    %884 = vmatpush.bf16.msra.mxu0 %v648
    %885 = vmatpush.bf16.msra.mxu0 %v640
    %886 = vmatpush.bf16.msra.mxu0 %v632
    %887 = vmatpush.bf16.msra.mxu0 %v624
    %888 = vmatmul.bf16.gmra.mxu0 %v236
    %v889 = vpop.f32.mrf.mxu0
    %v890 = vadd.f32 %v214, %v889
    %v891 = vpop.f32.mrf.mxu0
    %v892 = vadd.f32 %v214, %v891
    %893 = vdwg.mxu0
    %894 = vmatpush.bf16.msra.mxu0 %v744
    %895 = vmatpush.bf16.msra.mxu0 %v736
    %896 = vmatpush.bf16.msra.mxu0 %v728
    %897 = vmatpush.bf16.msra.mxu0 %v720
    %898 = vmatpush.bf16.msra.mxu0 %v712
    %899 = vmatpush.bf16.msra.mxu0 %v704
    %900 = vmatpush.bf16.msra.mxu0 %v696
    %901 = vmatpush.bf16.msra.mxu0 %v688
    %902 = vmatmul.bf16.gmra.mxu0 %v237
    %v903 = vpop.f32.mrf.mxu0
    %v904 = vadd.f32 %v890, %v903
    %v905 = vpop.f32.mrf.mxu0
    %v906 = vadd.f32 %v892, %v905
    %907 = vdwg.mxu0
    %908 = vmatpush.bf16.msra.mxu0 %v681
    %909 = vmatpush.bf16.msra.mxu0 %v673
    %910 = vmatpush.bf16.msra.mxu0 %v665
    %911 = vmatpush.bf16.msra.mxu0 %v657
    %912 = vmatpush.bf16.msra.mxu0 %v649
    %913 = vmatpush.bf16.msra.mxu0 %v641
    %914 = vmatpush.bf16.msra.mxu0 %v633
    %915 = vmatpush.bf16.msra.mxu0 %v625
    %916 = vmatmul.bf16.gmra.mxu0 %v236
    %v917 = vpop.f32.mrf.mxu0
    %v918 = vadd.f32 %v215, %v917
    %v919 = vpop.f32.mrf.mxu0
    %v920 = vadd.f32 %v215, %v919
    %921 = vdwg.mxu0
    %922 = vmatpush.bf16.msra.mxu0 %v745
    %923 = vmatpush.bf16.msra.mxu0 %v737
    %924 = vmatpush.bf16.msra.mxu0 %v729
    %925 = vmatpush.bf16.msra.mxu0 %v721
    %926 = vmatpush.bf16.msra.mxu0 %v713
    %927 = vmatpush.bf16.msra.mxu0 %v705
    %928 = vmatpush.bf16.msra.mxu0 %v697
    %929 = vmatpush.bf16.msra.mxu0 %v689
    %930 = vmatmul.bf16.gmra.mxu0 %v237
    %v931 = vpop.f32.mrf.mxu0
    %v932 = vadd.f32 %v918, %v931
    %v933 = vpop.f32.mrf.mxu0
    %v934 = vadd.f32 %v920, %v933
    %935 = vdwg.mxu0
    %936 = vmatpush.bf16.msra.mxu0 %v682
    %937 = vmatpush.bf16.msra.mxu0 %v674
    %938 = vmatpush.bf16.msra.mxu0 %v666
    %939 = vmatpush.bf16.msra.mxu0 %v658
    %940 = vmatpush.bf16.msra.mxu0 %v650
    %941 = vmatpush.bf16.msra.mxu0 %v642
    %942 = vmatpush.bf16.msra.mxu0 %v634
    %943 = vmatpush.bf16.msra.mxu0 %v626
    %944 = vmatmul.bf16.gmra.mxu0 %v236
    %v945 = vpop.f32.mrf.mxu0
    %v946 = vadd.f32 %v216, %v945
    %v947 = vpop.f32.mrf.mxu0
    %v948 = vadd.f32 %v216, %v947
    %949 = vdwg.mxu0
    %950 = vmatpush.bf16.msra.mxu0 %v746
    %951 = vmatpush.bf16.msra.mxu0 %v738
    %952 = vmatpush.bf16.msra.mxu0 %v730
    %953 = vmatpush.bf16.msra.mxu0 %v722
    %954 = vmatpush.bf16.msra.mxu0 %v714
    %955 = vmatpush.bf16.msra.mxu0 %v706
    %956 = vmatpush.bf16.msra.mxu0 %v698
    %957 = vmatpush.bf16.msra.mxu0 %v690
    %958 = vmatmul.bf16.gmra.mxu0 %v237
    %v959 = vpop.f32.mrf.mxu0
    %v960 = vadd.f32 %v946, %v959
    %v961 = vpop.f32.mrf.mxu0
    %v962 = vadd.f32 %v948, %v961
    %963 = vdwg.mxu0
    %964 = vmatpush.bf16.msra.mxu0 %v683
    %965 = vmatpush.bf16.msra.mxu0 %v675
    %966 = vmatpush.bf16.msra.mxu0 %v667
    %967 = vmatpush.bf16.msra.mxu0 %v659
    %968 = vmatpush.bf16.msra.mxu0 %v651
    %969 = vmatpush.bf16.msra.mxu0 %v643
    %970 = vmatpush.bf16.msra.mxu0 %v635
    %971 = vmatpush.bf16.msra.mxu0 %v627
    %972 = vmatmul.bf16.gmra.mxu0 %v236
    %v973 = vpop.f32.mrf.mxu0
    %v974 = vadd.f32 %v217, %v973
    %v975 = vpop.f32.mrf.mxu0
    %v976 = vadd.f32 %v217, %v975
    %977 = vdwg.mxu0
    %978 = vmatpush.bf16.msra.mxu0 %v747
    %979 = vmatpush.bf16.msra.mxu0 %v739
    %980 = vmatpush.bf16.msra.mxu0 %v731
    %981 = vmatpush.bf16.msra.mxu0 %v723
    %982 = vmatpush.bf16.msra.mxu0 %v715
    %983 = vmatpush.bf16.msra.mxu0 %v707
    %984 = vmatpush.bf16.msra.mxu0 %v699
    %985 = vmatpush.bf16.msra.mxu0 %v691
    %986 = vmatmul.bf16.gmra.mxu0 %v237
    %v987 = vpop.f32.mrf.mxu0
    %v988 = vadd.f32 %v974, %v987
    %v989 = vpop.f32.mrf.mxu0
    %v990 = vadd.f32 %v976, %v989
    %991 = vdwg.mxu0
    %992 = vmatpush.bf16.msra.mxu0 %v684
    %993 = vmatpush.bf16.msra.mxu0 %v676
    %994 = vmatpush.bf16.msra.mxu0 %v668
    %995 = vmatpush.bf16.msra.mxu0 %v660
    %996 = vmatpush.bf16.msra.mxu0 %v652
    %997 = vmatpush.bf16.msra.mxu0 %v644
    %998 = vmatpush.bf16.msra.mxu0 %v636
    %999 = vmatpush.bf16.msra.mxu0 %v628
    %1000 = vmatmul.bf16.gmra.mxu0 %v236
    %v1001 = vpop.f32.mrf.mxu0
    %v1002 = vadd.f32 %v218, %v1001
    %v1003 = vpop.f32.mrf.mxu0
    %v1004 = vadd.f32 %v218, %v1003
    %1005 = vdwg.mxu0
    %1006 = vmatpush.bf16.msra.mxu0 %v748
    %1007 = vmatpush.bf16.msra.mxu0 %v740
    %1008 = vmatpush.bf16.msra.mxu0 %v732
    %1009 = vmatpush.bf16.msra.mxu0 %v724
    %1010 = vmatpush.bf16.msra.mxu0 %v716
    %1011 = vmatpush.bf16.msra.mxu0 %v708
    %1012 = vmatpush.bf16.msra.mxu0 %v700
    %1013 = vmatpush.bf16.msra.mxu0 %v692
    %1014 = vmatmul.bf16.gmra.mxu0 %v237
    %v1015 = vpop.f32.mrf.mxu0
    %v1016 = vadd.f32 %v1002, %v1015
    %v1017 = vpop.f32.mrf.mxu0
    %v1018 = vadd.f32 %v1004, %v1017
    %1019 = vdwg.mxu0
    %1020 = vmatpush.bf16.msra.mxu0 %v685
    %1021 = vmatpush.bf16.msra.mxu0 %v677
    %1022 = vmatpush.bf16.msra.mxu0 %v669
    %1023 = vmatpush.bf16.msra.mxu0 %v661
    %1024 = vmatpush.bf16.msra.mxu0 %v653
    %1025 = vmatpush.bf16.msra.mxu0 %v645
    %1026 = vmatpush.bf16.msra.mxu0 %v637
    %1027 = vmatpush.bf16.msra.mxu0 %v629
    %1028 = vmatmul.bf16.gmra.mxu0 %v236
    %v1029 = vpop.f32.mrf.mxu0
    %v1030 = vadd.f32 %v219, %v1029
    %v1031 = vpop.f32.mrf.mxu0
    %v1032 = vadd.f32 %v219, %v1031
    %1033 = vdwg.mxu0
    %1034 = vmatpush.bf16.msra.mxu0 %v749
    %1035 = vmatpush.bf16.msra.mxu0 %v741
    %1036 = vmatpush.bf16.msra.mxu0 %v733
    %1037 = vmatpush.bf16.msra.mxu0 %v725
    %1038 = vmatpush.bf16.msra.mxu0 %v717
    %1039 = vmatpush.bf16.msra.mxu0 %v709
    %1040 = vmatpush.bf16.msra.mxu0 %v701
    %1041 = vmatpush.bf16.msra.mxu0 %v693
    %1042 = vmatmul.bf16.gmra.mxu0 %v237
    %v1043 = vpop.f32.mrf.mxu0
    %v1044 = vadd.f32 %v1030, %v1043
    %v1045 = vpop.f32.mrf.mxu0
    %v1046 = vadd.f32 %v1032, %v1045
    %1047 = vdwg.mxu0
    %1048 = vmatpush.bf16.msra.mxu0 %v686
    %1049 = vmatpush.bf16.msra.mxu0 %v678
    %1050 = vmatpush.bf16.msra.mxu0 %v670
    %1051 = vmatpush.bf16.msra.mxu0 %v662
    %1052 = vmatpush.bf16.msra.mxu0 %v654
    %1053 = vmatpush.bf16.msra.mxu0 %v646
    %1054 = vmatpush.bf16.msra.mxu0 %v638
    %1055 = vmatpush.bf16.msra.mxu0 %v630
    %1056 = vmatmul.bf16.gmra.mxu0 %v236
    %v1057 = vpop.f32.mrf.mxu0
    %v1058 = vadd.f32 %v220, %v1057
    %v1059 = vpop.f32.mrf.mxu0
    %v1060 = vadd.f32 %v220, %v1059
    %1061 = vdwg.mxu0
    %1062 = vmatpush.bf16.msra.mxu0 %v750
    %1063 = vmatpush.bf16.msra.mxu0 %v742
    %1064 = vmatpush.bf16.msra.mxu0 %v734
    %1065 = vmatpush.bf16.msra.mxu0 %v726
    %1066 = vmatpush.bf16.msra.mxu0 %v718
    %1067 = vmatpush.bf16.msra.mxu0 %v710
    %1068 = vmatpush.bf16.msra.mxu0 %v702
    %1069 = vmatpush.bf16.msra.mxu0 %v694
    %1070 = vmatmul.bf16.gmra.mxu0 %v237
    %v1071 = vpop.f32.mrf.mxu0
    %v1072 = vadd.f32 %v1058, %v1071
    %v1073 = vpop.f32.mrf.mxu0
    %v1074 = vadd.f32 %v1060, %v1073
    %1075 = vdwg.mxu0
    %1076 = vmatpush.bf16.msra.mxu0 %v687
    %1077 = vmatpush.bf16.msra.mxu0 %v679
    %1078 = vmatpush.bf16.msra.mxu0 %v671
    %1079 = vmatpush.bf16.msra.mxu0 %v663
    %1080 = vmatpush.bf16.msra.mxu0 %v655
    %1081 = vmatpush.bf16.msra.mxu0 %v647
    %1082 = vmatpush.bf16.msra.mxu0 %v639
    %1083 = vmatpush.bf16.msra.mxu0 %v631
    %1084 = vmatmul.bf16.gmra.mxu0 %v236
    %v1085 = vpop.f32.mrf.mxu0
    %v1086 = vadd.f32 %v221, %v1085
    %v1087 = vpop.f32.mrf.mxu0
    %v1088 = vadd.f32 %v221, %v1087
    %1089 = vdwg.mxu0
    %1090 = vmatpush.bf16.msra.mxu0 %v751
    %1091 = vmatpush.bf16.msra.mxu0 %v743
    %1092 = vmatpush.bf16.msra.mxu0 %v735
    %1093 = vmatpush.bf16.msra.mxu0 %v727
    %1094 = vmatpush.bf16.msra.mxu0 %v719
    %1095 = vmatpush.bf16.msra.mxu0 %v711
    %1096 = vmatpush.bf16.msra.mxu0 %v703
    %1097 = vmatpush.bf16.msra.mxu0 %v695
    %1098 = vmatmul.bf16.gmra.mxu0 %v237
    %v1099 = vpop.f32.mrf.mxu0
    %v1100 = vadd.f32 %v1086, %v1099
    %v1101 = vpop.f32.mrf.mxu0
    %v1102 = vadd.f32 %v1088, %v1101
    %1103 = vdwg.mxu0
    %v1104 = vmul.f32 %v904, 0.5
    %v1105 = vmul.f32 %v932, 0.5
    %v1106 = vmul.f32 %v960, 0.5
    %v1107 = vmul.f32 %v988, 0.5
    %v1108 = vmul.f32 %v1016, 0.5
    %v1109 = vmul.f32 %v1044, 0.5
    %v1110 = vmul.f32 %v1072, 0.5
    %v1111 = vmul.f32 %v1100, 0.5
    %v1112 = vmul.f32 %v906, 0.5
    %v1113 = vmul.f32 %v934, 0.5
    %v1114 = vmul.f32 %v962, 0.5
    %v1115 = vmul.f32 %v990, 0.5
    %v1116 = vmul.f32 %v1018, 0.5
    %v1117 = vmul.f32 %v1046, 0.5
    %v1118 = vmul.f32 %v1074, 0.5
    %v1119 = vmul.f32 %v1102, 0.5
    %v1120 = vmul.f32 %v904, 0.70710677
    %v1121 = vmul.f32 %v932, 0.70710677
    %v1122 = vmul.f32 %v960, 0.70710677
    %v1123 = vmul.f32 %v988, 0.70710677
    %v1124 = vmul.f32 %v1016, 0.70710677
    %v1125 = vmul.f32 %v1044, 0.70710677
    %v1126 = vmul.f32 %v1072, 0.70710677
    %v1127 = vmul.f32 %v1100, 0.70710677
    %v1128 = vmul.f32 %v906, 0.70710677
    %v1129 = vmul.f32 %v934, 0.70710677
    %v1130 = vmul.f32 %v962, 0.70710677
    %v1131 = vmul.f32 %v990, 0.70710677
    %v1132 = vmul.f32 %v1018, 0.70710677
    %v1133 = vmul.f32 %v1046, 0.70710677
    %v1134 = vmul.f32 %v1074, 0.70710677
    %v1135 = vmul.f32 %v1102, 0.70710677
    %v1136 = vmul.f32 %v1120, %v1120
    %v1137 = vmin.f32 16.0, %v1136
    %v1138 = vmul.f32 %v1137, 2.1237322e-06
    %v1139 = vadd.f32 %v1138, 0.00028619796
    %v1140 = vmul.f32 %v1137, %v1139
    %v1141 = vadd.f32 %v1140, 0.0036580483
    %v1142 = vmul.f32 %v1137, %v1141
    %v1143 = vadd.f32 %v1142, 0.05243302
    %v1144 = vmul.f32 %v1137, %v1143
    %v1145 = vadd.f32 %v1144, 0.18741608
    %v1146 = vmul.f32 %v1137, %v1145
    %v1147 = vadd.f32 %v1146, 1.1283791
    %v1148 = vmul.f32 %v1120, %v1147
    %v1149 = vmul.f32 %v1137, 3.8918573e-05
    %v1150 = vadd.f32 %v1149, 0.001143296
    %v1151 = vmul.f32 %v1137, %v1150
    %v1152 = vadd.f32 %v1151, 0.014752088
    %v1153 = vmul.f32 %v1137, %v1152
    %v1154 = vadd.f32 %v1153, 0.112945676
    %v1155 = vmul.f32 %v1137, %v1154
    %v1156 = vadd.f32 %v1155, 0.4994258
    %v1157 = vmul.f32 %v1137, %v1156
    %v1158 = vadd.f32 %v1157, 1.0
    %v1159 = vrcp.pop %v1158
    %v1160 = vmul.f32 %v1158, %v1159
    %v1161 = vsub.f32 1.0, %v1160
    %v1162 = vmul.f32 %v1159, %v1161
    %v1163 = vadd.f32 %v1159, %v1162
    %vm1164 = vweird.f32 %v1158
    %vm1165 = vweird.f32 %v1159
    %vm1166 = vmor %vm1164, %vm1165
    %v1167 = vsel %vm1166, %v1159, %v1163
    %v1168 = vand.u32 2147483647, %v1158
    %vm1169 = vcmp.eq.f32.partialorder %v1168, 8.507059e+37
    %v1170 = vand.u32 %v1158, 2147483648
    %v1171 = vor.u32 1.1754944e-38, %v1170
    %v1172 = vsel %vm1169, %v1171, %v1167
    %v1173 = vmul.f32 %v1148, %v1172
    %v1174 = vmin.f32 %v1173, 1.0
    %v1175 = vmax.f32 %v1174, -1.0
    %v1176 = vmul.f32 %v1121, %v1121
    %v1177 = vmin.f32 16.0, %v1176
    %v1178 = vmul.f32 %v1177, 2.1237322e-06
    %v1179 = vadd.f32 %v1178, 0.00028619796
    %v1180 = vmul.f32 %v1177, %v1179
    %v1181 = vadd.f32 %v1180, 0.0036580483
    %v1182 = vmul.f32 %v1177, %v1181
    %v1183 = vadd.f32 %v1182, 0.05243302
    %v1184 = vmul.f32 %v1177, %v1183
    %v1185 = vadd.f32 %v1184, 0.18741608
    %v1186 = vmul.f32 %v1177, %v1185
    %v1187 = vadd.f32 %v1186, 1.1283791
    %v1188 = vmul.f32 %v1121, %v1187
    %v1189 = vmul.f32 %v1177, 3.8918573e-05
    %v1190 = vadd.f32 %v1189, 0.001143296
    %v1191 = vmul.f32 %v1177, %v1190
    %v1192 = vadd.f32 %v1191, 0.014752088
    %v1193 = vmul.f32 %v1177, %v1192
    %v1194 = vadd.f32 %v1193, 0.112945676
    %v1195 = vmul.f32 %v1177, %v1194
    %v1196 = vadd.f32 %v1195, 0.4994258
    %v1197 = vmul.f32 %v1177, %v1196
    %v1198 = vadd.f32 %v1197, 1.0
    %v1199 = vrcp.pop %v1198
    %v1200 = vmul.f32 %v1198, %v1199
    %v1201 = vsub.f32 1.0, %v1200
    %v1202 = vmul.f32 %v1199, %v1201
    %v1203 = vadd.f32 %v1199, %v1202
    %vm1204 = vweird.f32 %v1198
    %vm1205 = vweird.f32 %v1199
    %vm1206 = vmor %vm1204, %vm1205
    %v1207 = vsel %vm1206, %v1199, %v1203
    %v1208 = vand.u32 2147483647, %v1198
    %vm1209 = vcmp.eq.f32.partialorder %v1208, 8.507059e+37
    %v1210 = vand.u32 %v1198, 2147483648
    %v1211 = vor.u32 1.1754944e-38, %v1210
    %v1212 = vsel %vm1209, %v1211, %v1207
    %v1213 = vmul.f32 %v1188, %v1212
    %v1214 = vmin.f32 %v1213, 1.0
    %v1215 = vmax.f32 %v1214, -1.0
    %v1216 = vmul.f32 %v1122, %v1122
    %v1217 = vmin.f32 16.0, %v1216
    %v1218 = vmul.f32 %v1217, 2.1237322e-06
    %v1219 = vadd.f32 %v1218, 0.00028619796
    %v1220 = vmul.f32 %v1217, %v1219
    %v1221 = vadd.f32 %v1220, 0.0036580483
    %v1222 = vmul.f32 %v1217, %v1221
    %v1223 = vadd.f32 %v1222, 0.05243302
    %v1224 = vmul.f32 %v1217, %v1223
    %v1225 = vadd.f32 %v1224, 0.18741608
    %v1226 = vmul.f32 %v1217, %v1225
    %v1227 = vadd.f32 %v1226, 1.1283791
    %v1228 = vmul.f32 %v1122, %v1227
    %v1229 = vmul.f32 %v1217, 3.8918573e-05
    %v1230 = vadd.f32 %v1229, 0.001143296
    %v1231 = vmul.f32 %v1217, %v1230
    %v1232 = vadd.f32 %v1231, 0.014752088
    %v1233 = vmul.f32 %v1217, %v1232
    %v1234 = vadd.f32 %v1233, 0.112945676
    %v1235 = vmul.f32 %v1217, %v1234
    %v1236 = vadd.f32 %v1235, 0.4994258
    %v1237 = vmul.f32 %v1217, %v1236
    %v1238 = vadd.f32 %v1237, 1.0
    %v1239 = vrcp.pop %v1238
    %v1240 = vmul.f32 %v1238, %v1239
    %v1241 = vsub.f32 1.0, %v1240
    %v1242 = vmul.f32 %v1239, %v1241
    %v1243 = vadd.f32 %v1239, %v1242
    %vm1244 = vweird.f32 %v1238
    %vm1245 = vweird.f32 %v1239
    %vm1246 = vmor %vm1244, %vm1245
    %v1247 = vsel %vm1246, %v1239, %v1243
    %v1248 = vand.u32 2147483647, %v1238
    %vm1249 = vcmp.eq.f32.partialorder %v1248, 8.507059e+37
    %v1250 = vand.u32 %v1238, 2147483648
    %v1251 = vor.u32 1.1754944e-38, %v1250
    %v1252 = vsel %vm1249, %v1251, %v1247
    %v1253 = vmul.f32 %v1228, %v1252
    %v1254 = vmin.f32 %v1253, 1.0
    %v1255 = vmax.f32 %v1254, -1.0
    %v1256 = vmul.f32 %v1123, %v1123
    %v1257 = vmin.f32 16.0, %v1256
    %v1258 = vmul.f32 %v1257, 2.1237322e-06
    %v1259 = vadd.f32 %v1258, 0.00028619796
    %v1260 = vmul.f32 %v1257, %v1259
    %v1261 = vadd.f32 %v1260, 0.0036580483
    %v1262 = vmul.f32 %v1257, %v1261
    %v1263 = vadd.f32 %v1262, 0.05243302
    %v1264 = vmul.f32 %v1257, %v1263
    %v1265 = vadd.f32 %v1264, 0.18741608
    %v1266 = vmul.f32 %v1257, %v1265
    %v1267 = vadd.f32 %v1266, 1.1283791
    %v1268 = vmul.f32 %v1123, %v1267
    %v1269 = vmul.f32 %v1257, 3.8918573e-05
    %v1270 = vadd.f32 %v1269, 0.001143296
    %v1271 = vmul.f32 %v1257, %v1270
    %v1272 = vadd.f32 %v1271, 0.014752088
    %v1273 = vmul.f32 %v1257, %v1272
    %v1274 = vadd.f32 %v1273, 0.112945676
    %v1275 = vmul.f32 %v1257, %v1274
    %v1276 = vadd.f32 %v1275, 0.4994258
    %v1277 = vmul.f32 %v1257, %v1276
    %v1278 = vadd.f32 %v1277, 1.0
    %v1279 = vrcp.pop %v1278
    %v1280 = vmul.f32 %v1278, %v1279
    %v1281 = vsub.f32 1.0, %v1280
    %v1282 = vmul.f32 %v1279, %v1281
    %v1283 = vadd.f32 %v1279, %v1282
    %vm1284 = vweird.f32 %v1278
    %vm1285 = vweird.f32 %v1279
    %vm1286 = vmor %vm1284, %vm1285
    %v1287 = vsel %vm1286, %v1279, %v1283
    %v1288 = vand.u32 2147483647, %v1278
    %vm1289 = vcmp.eq.f32.partialorder %v1288, 8.507059e+37
    %v1290 = vand.u32 %v1278, 2147483648
    %v1291 = vor.u32 1.1754944e-38, %v1290
    %v1292 = vsel %vm1289, %v1291, %v1287
    %v1293 = vmul.f32 %v1268, %v1292
    %v1294 = vmin.f32 %v1293, 1.0
    %v1295 = vmax.f32 %v1294, -1.0
    %v1296 = vmul.f32 %v1124, %v1124
    %v1297 = vmin.f32 16.0, %v1296
    %v1298 = vmul.f32 %v1297, 2.1237322e-06
    %v1299 = vadd.f32 %v1298, 0.00028619796
    %v1300 = vmul.f32 %v1297, %v1299
    %v1301 = vadd.f32 %v1300, 0.0036580483
    %v1302 = vmul.f32 %v1297, %v1301
    %v1303 = vadd.f32 %v1302, 0.05243302
    %v1304 = vmul.f32 %v1297, %v1303
    %v1305 = vadd.f32 %v1304, 0.18741608
    %v1306 = vmul.f32 %v1297, %v1305
    %v1307 = vadd.f32 %v1306, 1.1283791
    %v1308 = vmul.f32 %v1124, %v1307
    %v1309 = vmul.f32 %v1297, 3.8918573e-05
    %v1310 = vadd.f32 %v1309, 0.001143296
    %v1311 = vmul.f32 %v1297, %v1310
    %v1312 = vadd.f32 %v1311, 0.014752088
    %v1313 = vmul.f32 %v1297, %v1312
    %v1314 = vadd.f32 %v1313, 0.112945676
    %v1315 = vmul.f32 %v1297, %v1314
    %v1316 = vadd.f32 %v1315, 0.4994258
    %v1317 = vmul.f32 %v1297, %v1316
    %v1318 = vadd.f32 %v1317, 1.0
    %v1319 = vrcp.pop %v1318
    %v1320 = vmul.f32 %v1318, %v1319
    %v1321 = vsub.f32 1.0, %v1320
    %v1322 = vmul.f32 %v1319, %v1321
    %v1323 = vadd.f32 %v1319, %v1322
    %vm1324 = vweird.f32 %v1318
    %vm1325 = vweird.f32 %v1319
    %vm1326 = vmor %vm1324, %vm1325
    %v1327 = vsel %vm1326, %v1319, %v1323
    %v1328 = vand.u32 2147483647, %v1318
    %vm1329 = vcmp.eq.f32.partialorder %v1328, 8.507059e+37
    %v1330 = vand.u32 %v1318, 2147483648
    %v1331 = vor.u32 1.1754944e-38, %v1330
    %v1332 = vsel %vm1329, %v1331, %v1327
    %v1333 = vmul.f32 %v1308, %v1332
    %v1334 = vmin.f32 %v1333, 1.0
    %v1335 = vmax.f32 %v1334, -1.0
    %v1336 = vmul.f32 %v1125, %v1125
    %v1337 = vmin.f32 16.0, %v1336
    %v1338 = vmul.f32 %v1337, 2.1237322e-06
    %v1339 = vadd.f32 %v1338, 0.00028619796
    %v1340 = vmul.f32 %v1337, %v1339
    %v1341 = vadd.f32 %v1340, 0.0036580483
    %v1342 = vmul.f32 %v1337, %v1341
    %v1343 = vadd.f32 %v1342, 0.05243302
    %v1344 = vmul.f32 %v1337, %v1343
    %v1345 = vadd.f32 %v1344, 0.18741608
    %v1346 = vmul.f32 %v1337, %v1345
    %v1347 = vadd.f32 %v1346, 1.1283791
    %v1348 = vmul.f32 %v1125, %v1347
    %v1349 = vmul.f32 %v1337, 3.8918573e-05
    %v1350 = vadd.f32 %v1349, 0.001143296
    %v1351 = vmul.f32 %v1337, %v1350
    %v1352 = vadd.f32 %v1351, 0.014752088
    %v1353 = vmul.f32 %v1337, %v1352
    %v1354 = vadd.f32 %v1353, 0.112945676
    %v1355 = vmul.f32 %v1337, %v1354
    %v1356 = vadd.f32 %v1355, 0.4994258
    %v1357 = vmul.f32 %v1337, %v1356
    %v1358 = vadd.f32 %v1357, 1.0
    %v1359 = vrcp.pop %v1358
    %v1360 = vmul.f32 %v1358, %v1359
    %v1361 = vsub.f32 1.0, %v1360
    %v1362 = vmul.f32 %v1359, %v1361
    %v1363 = vadd.f32 %v1359, %v1362
    %vm1364 = vweird.f32 %v1358
    %vm1365 = vweird.f32 %v1359
    %vm1366 = vmor %vm1364, %vm1365
    %v1367 = vsel %vm1366, %v1359, %v1363
    %v1368 = vand.u32 2147483647, %v1358
    %vm1369 = vcmp.eq.f32.partialorder %v1368, 8.507059e+37
    %v1370 = vand.u32 %v1358, 2147483648
    %v1371 = vor.u32 1.1754944e-38, %v1370
    %v1372 = vsel %vm1369, %v1371, %v1367
    %v1373 = vmul.f32 %v1348, %v1372
    %v1374 = vmin.f32 %v1373, 1.0
    %v1375 = vmax.f32 %v1374, -1.0
    %v1376 = vmul.f32 %v1126, %v1126
    %v1377 = vmin.f32 16.0, %v1376
    %v1378 = vmul.f32 %v1377, 2.1237322e-06
    %v1379 = vadd.f32 %v1378, 0.00028619796
    %v1380 = vmul.f32 %v1377, %v1379
    %v1381 = vadd.f32 %v1380, 0.0036580483
    %v1382 = vmul.f32 %v1377, %v1381
    %v1383 = vadd.f32 %v1382, 0.05243302
    %v1384 = vmul.f32 %v1377, %v1383
    %v1385 = vadd.f32 %v1384, 0.18741608
    %v1386 = vmul.f32 %v1377, %v1385
    %v1387 = vadd.f32 %v1386, 1.1283791
    %v1388 = vmul.f32 %v1126, %v1387
    %v1389 = vmul.f32 %v1377, 3.8918573e-05
    %v1390 = vadd.f32 %v1389, 0.001143296
    %v1391 = vmul.f32 %v1377, %v1390
    %v1392 = vadd.f32 %v1391, 0.014752088
    %v1393 = vmul.f32 %v1377, %v1392
    %v1394 = vadd.f32 %v1393, 0.112945676
    %v1395 = vmul.f32 %v1377, %v1394
    %v1396 = vadd.f32 %v1395, 0.4994258
    %v1397 = vmul.f32 %v1377, %v1396
    %v1398 = vadd.f32 %v1397, 1.0
    %v1399 = vrcp.pop %v1398
    %v1400 = vmul.f32 %v1398, %v1399
    %v1401 = vsub.f32 1.0, %v1400
    %v1402 = vmul.f32 %v1399, %v1401
    %v1403 = vadd.f32 %v1399, %v1402
    %vm1404 = vweird.f32 %v1398
    %vm1405 = vweird.f32 %v1399
    %vm1406 = vmor %vm1404, %vm1405
    %v1407 = vsel %vm1406, %v1399, %v1403
    %v1408 = vand.u32 2147483647, %v1398
    %vm1409 = vcmp.eq.f32.partialorder %v1408, 8.507059e+37
    %v1410 = vand.u32 %v1398, 2147483648
    %v1411 = vor.u32 1.1754944e-38, %v1410
    %v1412 = vsel %vm1409, %v1411, %v1407
    %v1413 = vmul.f32 %v1388, %v1412
    %v1414 = vmin.f32 %v1413, 1.0
    %v1415 = vmax.f32 %v1414, -1.0
    %v1416 = vmul.f32 %v1127, %v1127
    %v1417 = vmin.f32 16.0, %v1416
    %v1418 = vmul.f32 %v1417, 2.1237322e-06
    %v1419 = vadd.f32 %v1418, 0.00028619796
    %v1420 = vmul.f32 %v1417, %v1419
    %v1421 = vadd.f32 %v1420, 0.0036580483
    %v1422 = vmul.f32 %v1417, %v1421
    %v1423 = vadd.f32 %v1422, 0.05243302
    %v1424 = vmul.f32 %v1417, %v1423
    %v1425 = vadd.f32 %v1424, 0.18741608
    %v1426 = vmul.f32 %v1417, %v1425
    %v1427 = vadd.f32 %v1426, 1.1283791
    %v1428 = vmul.f32 %v1127, %v1427
    %v1429 = vmul.f32 %v1417, 3.8918573e-05
    %v1430 = vadd.f32 %v1429, 0.001143296
    %v1431 = vmul.f32 %v1417, %v1430
    %v1432 = vadd.f32 %v1431, 0.014752088
    %v1433 = vmul.f32 %v1417, %v1432
    %v1434 = vadd.f32 %v1433, 0.112945676
    %v1435 = vmul.f32 %v1417, %v1434
    %v1436 = vadd.f32 %v1435, 0.4994258
    %v1437 = vmul.f32 %v1417, %v1436
    %v1438 = vadd.f32 %v1437, 1.0
    %v1439 = vrcp.pop %v1438
    %v1440 = vmul.f32 %v1438, %v1439
    %v1441 = vsub.f32 1.0, %v1440
    %v1442 = vmul.f32 %v1439, %v1441
    %v1443 = vadd.f32 %v1439, %v1442
    %vm1444 = vweird.f32 %v1438
    %vm1445 = vweird.f32 %v1439
    %vm1446 = vmor %vm1444, %vm1445
    %v1447 = vsel %vm1446, %v1439, %v1443
    %v1448 = vand.u32 2147483647, %v1438
    %vm1449 = vcmp.eq.f32.partialorder %v1448, 8.507059e+37
    %v1450 = vand.u32 %v1438, 2147483648
    %v1451 = vor.u32 1.1754944e-38, %v1450
    %v1452 = vsel %vm1449, %v1451, %v1447
    %v1453 = vmul.f32 %v1428, %v1452
    %v1454 = vmin.f32 %v1453, 1.0
    %v1455 = vmax.f32 %v1454, -1.0
    %v1456 = vmul.f32 %v1128, %v1128
    %v1457 = vmin.f32 16.0, %v1456
    %v1458 = vmul.f32 %v1457, 2.1237322e-06
    %v1459 = vadd.f32 %v1458, 0.00028619796
    %v1460 = vmul.f32 %v1457, %v1459
    %v1461 = vadd.f32 %v1460, 0.0036580483
    %v1462 = vmul.f32 %v1457, %v1461
    %v1463 = vadd.f32 %v1462, 0.05243302
    %v1464 = vmul.f32 %v1457, %v1463
    %v1465 = vadd.f32 %v1464, 0.18741608
    %v1466 = vmul.f32 %v1457, %v1465
    %v1467 = vadd.f32 %v1466, 1.1283791
    %v1468 = vmul.f32 %v1128, %v1467
    %v1469 = vmul.f32 %v1457, 3.8918573e-05
    %v1470 = vadd.f32 %v1469, 0.001143296
    %v1471 = vmul.f32 %v1457, %v1470
    %v1472 = vadd.f32 %v1471, 0.014752088
    %v1473 = vmul.f32 %v1457, %v1472
    %v1474 = vadd.f32 %v1473, 0.112945676
    %v1475 = vmul.f32 %v1457, %v1474
    %v1476 = vadd.f32 %v1475, 0.4994258
    %v1477 = vmul.f32 %v1457, %v1476
    %v1478 = vadd.f32 %v1477, 1.0
    %v1479 = vrcp.pop %v1478
    %v1480 = vmul.f32 %v1478, %v1479
    %v1481 = vsub.f32 1.0, %v1480
    %v1482 = vmul.f32 %v1479, %v1481
    %v1483 = vadd.f32 %v1479, %v1482
    %vm1484 = vweird.f32 %v1478
    %vm1485 = vweird.f32 %v1479
    %vm1486 = vmor %vm1484, %vm1485
    %v1487 = vsel %vm1486, %v1479, %v1483
    %v1488 = vand.u32 2147483647, %v1478
    %vm1489 = vcmp.eq.f32.partialorder %v1488, 8.507059e+37
    %v1490 = vand.u32 %v1478, 2147483648
    %v1491 = vor.u32 1.1754944e-38, %v1490
    %v1492 = vsel %vm1489, %v1491, %v1487
    %v1493 = vmul.f32 %v1468, %v1492
    %v1494 = vmin.f32 %v1493, 1.0
    %v1495 = vmax.f32 %v1494, -1.0
    %v1496 = vmul.f32 %v1129, %v1129
    %v1497 = vmin.f32 16.0, %v1496
    %v1498 = vmul.f32 %v1497, 2.1237322e-06
    %v1499 = vadd.f32 %v1498, 0.00028619796
    %v1500 = vmul.f32 %v1497, %v1499
    %v1501 = vadd.f32 %v1500, 0.0036580483
    %v1502 = vmul.f32 %v1497, %v1501
    %v1503 = vadd.f32 %v1502, 0.05243302
    %v1504 = vmul.f32 %v1497, %v1503
    %v1505 = vadd.f32 %v1504, 0.18741608
    %v1506 = vmul.f32 %v1497, %v1505
    %v1507 = vadd.f32 %v1506, 1.1283791
    %v1508 = vmul.f32 %v1129, %v1507
    %v1509 = vmul.f32 %v1497, 3.8918573e-05
    %v1510 = vadd.f32 %v1509, 0.001143296
    %v1511 = vmul.f32 %v1497, %v1510
    %v1512 = vadd.f32 %v1511, 0.014752088
    %v1513 = vmul.f32 %v1497, %v1512
    %v1514 = vadd.f32 %v1513, 0.112945676
    %v1515 = vmul.f32 %v1497, %v1514
    %v1516 = vadd.f32 %v1515, 0.4994258
    %v1517 = vmul.f32 %v1497, %v1516
    %v1518 = vadd.f32 %v1517, 1.0
    %v1519 = vrcp.pop %v1518
    %v1520 = vmul.f32 %v1518, %v1519
    %v1521 = vsub.f32 1.0, %v1520
    %v1522 = vmul.f32 %v1519, %v1521
    %v1523 = vadd.f32 %v1519, %v1522
    %vm1524 = vweird.f32 %v1518
    %vm1525 = vweird.f32 %v1519
    %vm1526 = vmor %vm1524, %vm1525
    %v1527 = vsel %vm1526, %v1519, %v1523
    %v1528 = vand.u32 2147483647, %v1518
    %vm1529 = vcmp.eq.f32.partialorder %v1528, 8.507059e+37
    %v1530 = vand.u32 %v1518, 2147483648
    %v1531 = vor.u32 1.1754944e-38, %v1530
    %v1532 = vsel %vm1529, %v1531, %v1527
    %v1533 = vmul.f32 %v1508, %v1532
    %v1534 = vmin.f32 %v1533, 1.0
    %v1535 = vmax.f32 %v1534, -1.0
    %v1536 = vmul.f32 %v1130, %v1130
    %v1537 = vmin.f32 16.0, %v1536
    %v1538 = vmul.f32 %v1537, 2.1237322e-06
    %v1539 = vadd.f32 %v1538, 0.00028619796
    %v1540 = vmul.f32 %v1537, %v1539
    %v1541 = vadd.f32 %v1540, 0.0036580483
    %v1542 = vmul.f32 %v1537, %v1541
    %v1543 = vadd.f32 %v1542, 0.05243302
    %v1544 = vmul.f32 %v1537, %v1543
    %v1545 = vadd.f32 %v1544, 0.18741608
    %v1546 = vmul.f32 %v1537, %v1545
    %v1547 = vadd.f32 %v1546, 1.1283791
    %v1548 = vmul.f32 %v1130, %v1547
    %v1549 = vmul.f32 %v1537, 3.8918573e-05
    %v1550 = vadd.f32 %v1549, 0.001143296
    %v1551 = vmul.f32 %v1537, %v1550
    %v1552 = vadd.f32 %v1551, 0.014752088
    %v1553 = vmul.f32 %v1537, %v1552
    %v1554 = vadd.f32 %v1553, 0.112945676
    %v1555 = vmul.f32 %v1537, %v1554
    %v1556 = vadd.f32 %v1555, 0.4994258
    %v1557 = vmul.f32 %v1537, %v1556
    %v1558 = vadd.f32 %v1557, 1.0
    %v1559 = vrcp.pop %v1558
    %v1560 = vmul.f32 %v1558, %v1559
    %v1561 = vsub.f32 1.0, %v1560
    %v1562 = vmul.f32 %v1559, %v1561
    %v1563 = vadd.f32 %v1559, %v1562
    %vm1564 = vweird.f32 %v1558
    %vm1565 = vweird.f32 %v1559
    %vm1566 = vmor %vm1564, %vm1565
    %v1567 = vsel %vm1566, %v1559, %v1563
    %v1568 = vand.u32 2147483647, %v1558
    %vm1569 = vcmp.eq.f32.partialorder %v1568, 8.507059e+37
    %v1570 = vand.u32 %v1558, 2147483648
    %v1571 = vor.u32 1.1754944e-38, %v1570
    %v1572 = vsel %vm1569, %v1571, %v1567
    %v1573 = vmul.f32 %v1548, %v1572
    %v1574 = vmin.f32 %v1573, 1.0
    %v1575 = vmax.f32 %v1574, -1.0
    %v1576 = vmul.f32 %v1131, %v1131
    %v1577 = vmin.f32 16.0, %v1576
    %v1578 = vmul.f32 %v1577, 2.1237322e-06
    %v1579 = vadd.f32 %v1578, 0.00028619796
    %v1580 = vmul.f32 %v1577, %v1579
    %v1581 = vadd.f32 %v1580, 0.0036580483
    %v1582 = vmul.f32 %v1577, %v1581
    %v1583 = vadd.f32 %v1582, 0.05243302
    %v1584 = vmul.f32 %v1577, %v1583
    %v1585 = vadd.f32 %v1584, 0.18741608
    %v1586 = vmul.f32 %v1577, %v1585
    %v1587 = vadd.f32 %v1586, 1.1283791
    %v1588 = vmul.f32 %v1131, %v1587
    %v1589 = vmul.f32 %v1577, 3.8918573e-05
    %v1590 = vadd.f32 %v1589, 0.001143296
    %v1591 = vmul.f32 %v1577, %v1590
    %v1592 = vadd.f32 %v1591, 0.014752088
    %v1593 = vmul.f32 %v1577, %v1592
    %v1594 = vadd.f32 %v1593, 0.112945676
    %v1595 = vmul.f32 %v1577, %v1594
    %v1596 = vadd.f32 %v1595, 0.4994258
    %v1597 = vmul.f32 %v1577, %v1596
    %v1598 = vadd.f32 %v1597, 1.0
    %v1599 = vrcp.pop %v1598
    %v1600 = vmul.f32 %v1598, %v1599
    %v1601 = vsub.f32 1.0, %v1600
    %v1602 = vmul.f32 %v1599, %v1601
    %v1603 = vadd.f32 %v1599, %v1602
    %vm1604 = vweird.f32 %v1598
    %vm1605 = vweird.f32 %v1599
    %vm1606 = vmor %vm1604, %vm1605
    %v1607 = vsel %vm1606, %v1599, %v1603
    %v1608 = vand.u32 2147483647, %v1598
    %vm1609 = vcmp.eq.f32.partialorder %v1608, 8.507059e+37
    %v1610 = vand.u32 %v1598, 2147483648
    %v1611 = vor.u32 1.1754944e-38, %v1610
    %v1612 = vsel %vm1609, %v1611, %v1607
    %v1613 = vmul.f32 %v1588, %v1612
    %v1614 = vmin.f32 %v1613, 1.0
    %v1615 = vmax.f32 %v1614, -1.0
    %v1616 = vmul.f32 %v1132, %v1132
    %v1617 = vmin.f32 16.0, %v1616
    %v1618 = vmul.f32 %v1617, 2.1237322e-06
    %v1619 = vadd.f32 %v1618, 0.00028619796
    %v1620 = vmul.f32 %v1617, %v1619
    %v1621 = vadd.f32 %v1620, 0.0036580483
    %v1622 = vmul.f32 %v1617, %v1621
    %v1623 = vadd.f32 %v1622, 0.05243302
    %v1624 = vmul.f32 %v1617, %v1623
    %v1625 = vadd.f32 %v1624, 0.18741608
    %v1626 = vmul.f32 %v1617, %v1625
    %v1627 = vadd.f32 %v1626, 1.1283791
    %v1628 = vmul.f32 %v1132, %v1627
    %v1629 = vmul.f32 %v1617, 3.8918573e-05
    %v1630 = vadd.f32 %v1629, 0.001143296
    %v1631 = vmul.f32 %v1617, %v1630
    %v1632 = vadd.f32 %v1631, 0.014752088
    %v1633 = vmul.f32 %v1617, %v1632
    %v1634 = vadd.f32 %v1633, 0.112945676
    %v1635 = vmul.f32 %v1617, %v1634
    %v1636 = vadd.f32 %v1635, 0.4994258
    %v1637 = vmul.f32 %v1617, %v1636
    %v1638 = vadd.f32 %v1637, 1.0
    %v1639 = vrcp.pop %v1638
    %v1640 = vmul.f32 %v1638, %v1639
    %v1641 = vsub.f32 1.0, %v1640
    %v1642 = vmul.f32 %v1639, %v1641
    %v1643 = vadd.f32 %v1639, %v1642
    %vm1644 = vweird.f32 %v1638
    %vm1645 = vweird.f32 %v1639
    %vm1646 = vmor %vm1644, %vm1645
    %v1647 = vsel %vm1646, %v1639, %v1643
    %v1648 = vand.u32 2147483647, %v1638
    %vm1649 = vcmp.eq.f32.partialorder %v1648, 8.507059e+37
    %v1650 = vand.u32 %v1638, 2147483648
    %v1651 = vor.u32 1.1754944e-38, %v1650
    %v1652 = vsel %vm1649, %v1651, %v1647
    %v1653 = vmul.f32 %v1628, %v1652
    %v1654 = vmin.f32 %v1653, 1.0
    %v1655 = vmax.f32 %v1654, -1.0
    %v1656 = vmul.f32 %v1133, %v1133
    %v1657 = vmin.f32 16.0, %v1656
    %v1658 = vmul.f32 %v1657, 2.1237322e-06
    %v1659 = vadd.f32 %v1658, 0.00028619796
    %v1660 = vmul.f32 %v1657, %v1659
    %v1661 = vadd.f32 %v1660, 0.0036580483
    %v1662 = vmul.f32 %v1657, %v1661
    %v1663 = vadd.f32 %v1662, 0.05243302
    %v1664 = vmul.f32 %v1657, %v1663
    %v1665 = vadd.f32 %v1664, 0.18741608
    %v1666 = vmul.f32 %v1657, %v1665
    %v1667 = vadd.f32 %v1666, 1.1283791
    %v1668 = vmul.f32 %v1133, %v1667
    %v1669 = vmul.f32 %v1657, 3.8918573e-05
    %v1670 = vadd.f32 %v1669, 0.001143296
    %v1671 = vmul.f32 %v1657, %v1670
    %v1672 = vadd.f32 %v1671, 0.014752088
    %v1673 = vmul.f32 %v1657, %v1672
    %v1674 = vadd.f32 %v1673, 0.112945676
    %v1675 = vmul.f32 %v1657, %v1674
    %v1676 = vadd.f32 %v1675, 0.4994258
    %v1677 = vmul.f32 %v1657, %v1676
    %v1678 = vadd.f32 %v1677, 1.0
    %v1679 = vrcp.pop %v1678
    %v1680 = vmul.f32 %v1678, %v1679
    %v1681 = vsub.f32 1.0, %v1680
    %v1682 = vmul.f32 %v1679, %v1681
    %v1683 = vadd.f32 %v1679, %v1682
    %vm1684 = vweird.f32 %v1678
    %vm1685 = vweird.f32 %v1679
    %vm1686 = vmor %vm1684, %vm1685
    %v1687 = vsel %vm1686, %v1679, %v1683
    %v1688 = vand.u32 2147483647, %v1678
    %vm1689 = vcmp.eq.f32.partialorder %v1688, 8.507059e+37
    %v1690 = vand.u32 %v1678, 2147483648
    %v1691 = vor.u32 1.1754944e-38, %v1690
    %v1692 = vsel %vm1689, %v1691, %v1687
    %v1693 = vmul.f32 %v1668, %v1692
    %v1694 = vmin.f32 %v1693, 1.0
    %v1695 = vmax.f32 %v1694, -1.0
    %v1696 = vmul.f32 %v1134, %v1134
    %v1697 = vmin.f32 16.0, %v1696
    %v1698 = vmul.f32 %v1697, 2.1237322e-06
    %v1699 = vadd.f32 %v1698, 0.00028619796
    %v1700 = vmul.f32 %v1697, %v1699
    %v1701 = vadd.f32 %v1700, 0.0036580483
    %v1702 = vmul.f32 %v1697, %v1701
    %v1703 = vadd.f32 %v1702, 0.05243302
    %v1704 = vmul.f32 %v1697, %v1703
    %v1705 = vadd.f32 %v1704, 0.18741608
    %v1706 = vmul.f32 %v1697, %v1705
    %v1707 = vadd.f32 %v1706, 1.1283791
    %v1708 = vmul.f32 %v1134, %v1707
    %v1709 = vmul.f32 %v1697, 3.8918573e-05
    %v1710 = vadd.f32 %v1709, 0.001143296
    %v1711 = vmul.f32 %v1697, %v1710
    %v1712 = vadd.f32 %v1711, 0.014752088
    %v1713 = vmul.f32 %v1697, %v1712
    %v1714 = vadd.f32 %v1713, 0.112945676
    %v1715 = vmul.f32 %v1697, %v1714
    %v1716 = vadd.f32 %v1715, 0.4994258
    %v1717 = vmul.f32 %v1697, %v1716
    %v1718 = vadd.f32 %v1717, 1.0
    %v1719 = vrcp.pop %v1718
    %v1720 = vmul.f32 %v1718, %v1719
    %v1721 = vsub.f32 1.0, %v1720
    %v1722 = vmul.f32 %v1719, %v1721
    %v1723 = vadd.f32 %v1719, %v1722
    %vm1724 = vweird.f32 %v1718
    %vm1725 = vweird.f32 %v1719
    %vm1726 = vmor %vm1724, %vm1725
    %v1727 = vsel %vm1726, %v1719, %v1723
    %v1728 = vand.u32 2147483647, %v1718
    %vm1729 = vcmp.eq.f32.partialorder %v1728, 8.507059e+37
    %v1730 = vand.u32 %v1718, 2147483648
    %v1731 = vor.u32 1.1754944e-38, %v1730
    %v1732 = vsel %vm1729, %v1731, %v1727
    %v1733 = vmul.f32 %v1708, %v1732
    %v1734 = vmin.f32 %v1733, 1.0
    %v1735 = vmax.f32 %v1734, -1.0
    %v1736 = vmul.f32 %v1135, %v1135
    %v1737 = vmin.f32 16.0, %v1736
    %v1738 = vmul.f32 %v1737, 2.1237322e-06
    %v1739 = vadd.f32 %v1738, 0.00028619796
    %v1740 = vmul.f32 %v1737, %v1739
    %v1741 = vadd.f32 %v1740, 0.0036580483
    %v1742 = vmul.f32 %v1737, %v1741
    %v1743 = vadd.f32 %v1742, 0.05243302
    %v1744 = vmul.f32 %v1737, %v1743
    %v1745 = vadd.f32 %v1744, 0.18741608
    %v1746 = vmul.f32 %v1737, %v1745
    %v1747 = vadd.f32 %v1746, 1.1283791
    %v1748 = vmul.f32 %v1135, %v1747
    %v1749 = vmul.f32 %v1737, 3.8918573e-05
    %v1750 = vadd.f32 %v1749, 0.001143296
    %v1751 = vmul.f32 %v1737, %v1750
    %v1752 = vadd.f32 %v1751, 0.014752088
    %v1753 = vmul.f32 %v1737, %v1752
    %v1754 = vadd.f32 %v1753, 0.112945676
    %v1755 = vmul.f32 %v1737, %v1754
    %v1756 = vadd.f32 %v1755, 0.4994258
    %v1757 = vmul.f32 %v1737, %v1756
    %v1758 = vadd.f32 %v1757, 1.0
    %v1759 = vrcp.pop %v1758
    %v1760 = vmul.f32 %v1758, %v1759
    %v1761 = vsub.f32 1.0, %v1760
    %v1762 = vmul.f32 %v1759, %v1761
    %v1763 = vadd.f32 %v1759, %v1762
    %vm1764 = vweird.f32 %v1758
    %vm1765 = vweird.f32 %v1759
    %vm1766 = vmor %vm1764, %vm1765
    %v1767 = vsel %vm1766, %v1759, %v1763
    %v1768 = vand.u32 2147483647, %v1758
    %vm1769 = vcmp.eq.f32.partialorder %v1768, 8.507059e+37
    %v1770 = vand.u32 %v1758, 2147483648
    %v1771 = vor.u32 1.1754944e-38, %v1770
    %v1772 = vsel %vm1769, %v1771, %v1767
    %v1773 = vmul.f32 %v1748, %v1772
    %v1774 = vmin.f32 %v1773, 1.0
    %v1775 = vmax.f32 %v1774, -1.0
    %v1776 = vadd.f32 %v1175, 1.0
    %v1777 = vadd.f32 %v1215, 1.0
    %v1778 = vadd.f32 %v1255, 1.0
    %v1779 = vadd.f32 %v1295, 1.0
    %v1780 = vadd.f32 %v1335, 1.0
    %v1781 = vadd.f32 %v1375, 1.0
    %v1782 = vadd.f32 %v1415, 1.0
    %v1783 = vadd.f32 %v1455, 1.0
    %v1784 = vadd.f32 %v1495, 1.0
    %v1785 = vadd.f32 %v1535, 1.0
    %v1786 = vadd.f32 %v1575, 1.0
    %v1787 = vadd.f32 %v1615, 1.0
    %v1788 = vadd.f32 %v1655, 1.0
    %v1789 = vadd.f32 %v1695, 1.0
    %v1790 = vadd.f32 %v1735, 1.0
    %v1791 = vadd.f32 %v1775, 1.0
    %v1792 = vmul.f32 %v1104, %v1776
    %v1793 = vmul.f32 %v1105, %v1777
    %v1794 = vmul.f32 %v1106, %v1778
    %v1795 = vmul.f32 %v1107, %v1779
    %v1796 = vmul.f32 %v1108, %v1780
    %v1797 = vmul.f32 %v1109, %v1781
    %v1798 = vmul.f32 %v1110, %v1782
    %v1799 = vmul.f32 %v1111, %v1783
    %v1800 = vmul.f32 %v1112, %v1784
    %v1801 = vmul.f32 %v1113, %v1785
    %v1802 = vmul.f32 %v1114, %v1786
    %v1803 = vmul.f32 %v1115, %v1787
    %v1804 = vmul.f32 %v1116, %v1788
    %v1805 = vmul.f32 %v1117, %v1789
    %v1806 = vmul.f32 %v1118, %v1790
    %v1807 = vmul.f32 %v1119, %v1791
    %v1808 = vpack.c.bf16 %v1800, %v1792
    %v1809 = vpack.c.bf16 %v1801, %v1793
    %v1810 = vpack.c.bf16 %v1802, %v1794
    %v1811 = vpack.c.bf16 %v1803, %v1795
    %v1812 = vpack.c.bf16 %v1804, %v1796
    %v1813 = vpack.c.bf16 %v1805, %v1797
    %v1814 = vpack.c.bf16 %v1806, %v1798
    %v1815 = vpack.c.bf16 %v1807, %v1799
    %v1816 = vld [vmem:[#allocation9] sm:$0xff]
    %v1817 = vld [vmem:[#allocation9 + $0x8] sm:$0xff]
    %v1818 = vld [vmem:[#allocation9 + $0x10] sm:$0xff]
    %v1819 = vld [vmem:[#allocation9 + $0x18] sm:$0xff]
    %v1820 = vld [vmem:[#allocation9 + $0x20] sm:$0xff]
    %v1821 = vld [vmem:[#allocation9 + $0x28] sm:$0xff]
    %v1822 = vld [vmem:[#allocation9 + $0x30] sm:$0xff]
    %v1823 = vld [vmem:[#allocation9 + $0x38] sm:$0xff]
    %v1824 = vld [vmem:[#allocation9 + $0x40] sm:$0xff]
    %v1825 = vld [vmem:[#allocation9 + $0x48] sm:$0xff]
    %v1826 = vld [vmem:[#allocation9 + $0x50] sm:$0xff]
    %v1827 = vld [vmem:[#allocation9 + $0x58] sm:$0xff]
    %v1828 = vld [vmem:[#allocation9 + $0x60] sm:$0xff]
    %v1829 = vld [vmem:[#allocation9 + $0x68] sm:$0xff]
    %v1830 = vld [vmem:[#allocation9 + $0x70] sm:$0xff]
    %v1831 = vld [vmem:[#allocation9 + $0x78] sm:$0xff]
    %v1832 = vld [vmem:[#allocation9 + $0x80] sm:$0xff]
    %v1833 = vld [vmem:[#allocation9 + $0x88] sm:$0xff]
    %v1834 = vld [vmem:[#allocation9 + $0x90] sm:$0xff]
    %v1835 = vld [vmem:[#allocation9 + $0x98] sm:$0xff]
    %v1836 = vld [vmem:[#allocation9 + $0xa0] sm:$0xff]
    %v1837 = vld [vmem:[#allocation9 + $0xa8] sm:$0xff]
    %v1838 = vld [vmem:[#allocation9 + $0xb0] sm:$0xff]
    %v1839 = vld [vmem:[#allocation9 + $0xb8] sm:$0xff]
    %v1840 = vld [vmem:[#allocation9 + $0xc0] sm:$0xff]
    %v1841 = vld [vmem:[#allocation9 + $0xc8] sm:$0xff]
    %v1842 = vld [vmem:[#allocation9 + $0xd0] sm:$0xff]
    %v1843 = vld [vmem:[#allocation9 + $0xd8] sm:$0xff]
    %v1844 = vld [vmem:[#allocation9 + $0xe0] sm:$0xff]
    %v1845 = vld [vmem:[#allocation9 + $0xe8] sm:$0xff]
    %v1846 = vld [vmem:[#allocation9 + $0xf0] sm:$0xff]
    %v1847 = vld [vmem:[#allocation9 + $0xf8] sm:$0xff]
    %v1848 = vld [vmem:[#allocation9 + $0x100] sm:$0xff]
    %v1849 = vld [vmem:[#allocation9 + $0x108] sm:$0xff]
    %v1850 = vld [vmem:[#allocation9 + $0x110] sm:$0xff]
    %v1851 = vld [vmem:[#allocation9 + $0x118] sm:$0xff]
    %v1852 = vld [vmem:[#allocation9 + $0x120] sm:$0xff]
    %v1853 = vld [vmem:[#allocation9 + $0x128] sm:$0xff]
    %v1854 = vld [vmem:[#allocation9 + $0x130] sm:$0xff]
    %v1855 = vld [vmem:[#allocation9 + $0x138] sm:$0xff]
    %v1856 = vld [vmem:[#allocation9 + $0x140] sm:$0xff]
    %v1857 = vld [vmem:[#allocation9 + $0x148] sm:$0xff]
    %v1858 = vld [vmem:[#allocation9 + $0x150] sm:$0xff]
    %v1859 = vld [vmem:[#allocation9 + $0x158] sm:$0xff]
    %v1860 = vld [vmem:[#allocation9 + $0x160] sm:$0xff]
    %v1861 = vld [vmem:[#allocation9 + $0x168] sm:$0xff]
    %v1862 = vld [vmem:[#allocation9 + $0x170] sm:$0xff]
    %v1863 = vld [vmem:[#allocation9 + $0x178] sm:$0xff]
    %v1864 = vld [vmem:[#allocation9 + $0x180] sm:$0xff]
    %v1865 = vld [vmem:[#allocation9 + $0x188] sm:$0xff]
    %v1866 = vld [vmem:[#allocation9 + $0x190] sm:$0xff]
    %v1867 = vld [vmem:[#allocation9 + $0x198] sm:$0xff]
    %v1868 = vld [vmem:[#allocation9 + $0x1a0] sm:$0xff]
    %v1869 = vld [vmem:[#allocation9 + $0x1a8] sm:$0xff]
    %v1870 = vld [vmem:[#allocation9 + $0x1b0] sm:$0xff]
    %v1871 = vld [vmem:[#allocation9 + $0x1b8] sm:$0xff]
    %v1872 = vld [vmem:[#allocation9 + $0x1c0] sm:$0xff]
    %v1873 = vld [vmem:[#allocation9 + $0x1c8] sm:$0xff]
    %v1874 = vld [vmem:[#allocation9 + $0x1d0] sm:$0xff]
    %v1875 = vld [vmem:[#allocation9 + $0x1d8] sm:$0xff]
    %v1876 = vld [vmem:[#allocation9 + $0x1e0] sm:$0xff]
    %v1877 = vld [vmem:[#allocation9 + $0x1e8] sm:$0xff]
    %v1878 = vld [vmem:[#allocation9 + $0x1f0] sm:$0xff]
    %v1879 = vld [vmem:[#allocation9 + $0x1f8] sm:$0xff]
    %v1880 = vld [vmem:[#allocation9 + $0x200] sm:$0xff]
    %v1881 = vld [vmem:[#allocation9 + $0x208] sm:$0xff]
    %v1882 = vld [vmem:[#allocation9 + $0x210] sm:$0xff]
    %v1883 = vld [vmem:[#allocation9 + $0x218] sm:$0xff]
    %v1884 = vld [vmem:[#allocation9 + $0x220] sm:$0xff]
    %v1885 = vld [vmem:[#allocation9 + $0x228] sm:$0xff]
    %v1886 = vld [vmem:[#allocation9 + $0x230] sm:$0xff]
    %v1887 = vld [vmem:[#allocation9 + $0x238] sm:$0xff]
    %v1888 = vld [vmem:[#allocation9 + $0x240] sm:$0xff]
    %v1889 = vld [vmem:[#allocation9 + $0x248] sm:$0xff]
    %v1890 = vld [vmem:[#allocation9 + $0x250] sm:$0xff]
    %v1891 = vld [vmem:[#allocation9 + $0x258] sm:$0xff]
    %v1892 = vld [vmem:[#allocation9 + $0x260] sm:$0xff]
    %v1893 = vld [vmem:[#allocation9 + $0x268] sm:$0xff]
    %v1894 = vld [vmem:[#allocation9 + $0x270] sm:$0xff]
    %v1895 = vld [vmem:[#allocation9 + $0x278] sm:$0xff]
    %v1896 = vld [vmem:[#allocation9 + $0x280] sm:$0xff]
    %v1897 = vld [vmem:[#allocation9 + $0x288] sm:$0xff]
    %v1898 = vld [vmem:[#allocation9 + $0x290] sm:$0xff]
    %v1899 = vld [vmem:[#allocation9 + $0x298] sm:$0xff]
    %v1900 = vld [vmem:[#allocation9 + $0x2a0] sm:$0xff]
    %v1901 = vld [vmem:[#allocation9 + $0x2a8] sm:$0xff]
    %v1902 = vld [vmem:[#allocation9 + $0x2b0] sm:$0xff]
    %v1903 = vld [vmem:[#allocation9 + $0x2b8] sm:$0xff]
    %v1904 = vld [vmem:[#allocation9 + $0x2c0] sm:$0xff]
    %v1905 = vld [vmem:[#allocation9 + $0x2c8] sm:$0xff]
    %v1906 = vld [vmem:[#allocation9 + $0x2d0] sm:$0xff]
    %v1907 = vld [vmem:[#allocation9 + $0x2d8] sm:$0xff]
    %v1908 = vld [vmem:[#allocation9 + $0x2e0] sm:$0xff]
    %v1909 = vld [vmem:[#allocation9 + $0x2e8] sm:$0xff]
    %v1910 = vld [vmem:[#allocation9 + $0x2f0] sm:$0xff]
    %v1911 = vld [vmem:[#allocation9 + $0x2f8] sm:$0xff]
    %v1912 = vld [vmem:[#allocation9 + $0x300] sm:$0xff]
    %v1913 = vld [vmem:[#allocation9 + $0x308] sm:$0xff]
    %v1914 = vld [vmem:[#allocation9 + $0x310] sm:$0xff]
    %v1915 = vld [vmem:[#allocation9 + $0x318] sm:$0xff]
    %v1916 = vld [vmem:[#allocation9 + $0x320] sm:$0xff]
    %v1917 = vld [vmem:[#allocation9 + $0x328] sm:$0xff]
    %v1918 = vld [vmem:[#allocation9 + $0x330] sm:$0xff]
    %v1919 = vld [vmem:[#allocation9 + $0x338] sm:$0xff]
    %v1920 = vld [vmem:[#allocation9 + $0x340] sm:$0xff]
    %v1921 = vld [vmem:[#allocation9 + $0x348] sm:$0xff]
    %v1922 = vld [vmem:[#allocation9 + $0x350] sm:$0xff]
    %v1923 = vld [vmem:[#allocation9 + $0x358] sm:$0xff]
    %v1924 = vld [vmem:[#allocation9 + $0x360] sm:$0xff]
    %v1925 = vld [vmem:[#allocation9 + $0x368] sm:$0xff]
    %v1926 = vld [vmem:[#allocation9 + $0x370] sm:$0xff]
    %v1927 = vld [vmem:[#allocation9 + $0x378] sm:$0xff]
    %v1928 = vld [vmem:[#allocation9 + $0x380] sm:$0xff]
    %v1929 = vld [vmem:[#allocation9 + $0x388] sm:$0xff]
    %v1930 = vld [vmem:[#allocation9 + $0x390] sm:$0xff]
    %v1931 = vld [vmem:[#allocation9 + $0x398] sm:$0xff]
    %v1932 = vld [vmem:[#allocation9 + $0x3a0] sm:$0xff]
    %v1933 = vld [vmem:[#allocation9 + $0x3a8] sm:$0xff]
    %v1934 = vld [vmem:[#allocation9 + $0x3b0] sm:$0xff]
    %v1935 = vld [vmem:[#allocation9 + $0x3b8] sm:$0xff]
    %v1936 = vld [vmem:[#allocation9 + $0x3c0] sm:$0xff]
    %v1937 = vld [vmem:[#allocation9 + $0x3c8] sm:$0xff]
    %v1938 = vld [vmem:[#allocation9 + $0x3d0] sm:$0xff]
    %v1939 = vld [vmem:[#allocation9 + $0x3d8] sm:$0xff]
    %v1940 = vld [vmem:[#allocation9 + $0x3e0] sm:$0xff]
    %v1941 = vld [vmem:[#allocation9 + $0x3e8] sm:$0xff]
    %v1942 = vld [vmem:[#allocation9 + $0x3f0] sm:$0xff]
    %v1943 = vld [vmem:[#allocation9 + $0x3f8] sm:$0xff]
    %v2072 = vunpack.c.l.b16 %v1816
    %v2073 = vunpack.c.h.b16 %v1816
    %v2074 = vunpack.c.l.b16 %v1817
    %v2075 = vunpack.c.h.b16 %v1817
    %v2076 = vunpack.c.l.b16 %v1818
    %v2077 = vunpack.c.h.b16 %v1818
    %v2078 = vunpack.c.l.b16 %v1819
    %v2079 = vunpack.c.h.b16 %v1819
    %v2080 = vunpack.c.l.b16 %v1820
    %v2081 = vunpack.c.h.b16 %v1820
    %v2082 = vunpack.c.l.b16 %v1821
    %v2083 = vunpack.c.h.b16 %v1821
    %v2084 = vunpack.c.l.b16 %v1822
    %v2085 = vunpack.c.h.b16 %v1822
    %v2086 = vunpack.c.l.b16 %v1823
    %v2087 = vunpack.c.h.b16 %v1823
    %v2088 = vunpack.c.l.b16 %v1824
    %v2089 = vunpack.c.h.b16 %v1824
    %v2090 = vunpack.c.l.b16 %v1825
    %v2091 = vunpack.c.h.b16 %v1825
    %v2092 = vunpack.c.l.b16 %v1826
    %v2093 = vunpack.c.h.b16 %v1826
    %v2094 = vunpack.c.l.b16 %v1827
    %v2095 = vunpack.c.h.b16 %v1827
    %v2096 = vunpack.c.l.b16 %v1828
    %v2097 = vunpack.c.h.b16 %v1828
    %v2098 = vunpack.c.l.b16 %v1829
    %v2099 = vunpack.c.h.b16 %v1829
    %v2100 = vunpack.c.l.b16 %v1830
    %v2101 = vunpack.c.h.b16 %v1830
    %v2102 = vunpack.c.l.b16 %v1831
    %v2103 = vunpack.c.h.b16 %v1831
    %v2104 = vunpack.c.l.b16 %v1832
    %v2105 = vunpack.c.h.b16 %v1832
    %v2106 = vunpack.c.l.b16 %v1833
    %v2107 = vunpack.c.h.b16 %v1833
    %v2108 = vunpack.c.l.b16 %v1834
    %v2109 = vunpack.c.h.b16 %v1834
    %v2110 = vunpack.c.l.b16 %v1835
    %v2111 = vunpack.c.h.b16 %v1835
    %v2112 = vunpack.c.l.b16 %v1836
    %v2113 = vunpack.c.h.b16 %v1836
    %v2114 = vunpack.c.l.b16 %v1837
    %v2115 = vunpack.c.h.b16 %v1837
    %v2116 = vunpack.c.l.b16 %v1838
    %v2117 = vunpack.c.h.b16 %v1838
    %v2118 = vunpack.c.l.b16 %v1839
    %v2119 = vunpack.c.h.b16 %v1839
    %v2120 = vunpack.c.l.b16 %v1840
    %v2121 = vunpack.c.h.b16 %v1840
    %v2122 = vunpack.c.l.b16 %v1841
    %v2123 = vunpack.c.h.b16 %v1841
    %v2124 = vunpack.c.l.b16 %v1842
    %v2125 = vunpack.c.h.b16 %v1842
    %v2126 = vunpack.c.l.b16 %v1843
    %v2127 = vunpack.c.h.b16 %v1843
    %v2128 = vunpack.c.l.b16 %v1844
    %v2129 = vunpack.c.h.b16 %v1844
    %v2130 = vunpack.c.l.b16 %v1845
    %v2131 = vunpack.c.h.b16 %v1845
    %v2132 = vunpack.c.l.b16 %v1846
    %v2133 = vunpack.c.h.b16 %v1846
    %v2134 = vunpack.c.l.b16 %v1847
    %v2135 = vunpack.c.h.b16 %v1847
    %v2136 = vunpack.c.l.b16 %v1848
    %v2137 = vunpack.c.h.b16 %v1848
    %v2138 = vunpack.c.l.b16 %v1849
    %v2139 = vunpack.c.h.b16 %v1849
    %v2140 = vunpack.c.l.b16 %v1850
    %v2141 = vunpack.c.h.b16 %v1850
    %v2142 = vunpack.c.l.b16 %v1851
    %v2143 = vunpack.c.h.b16 %v1851
    %v2144 = vunpack.c.l.b16 %v1852
    %v2145 = vunpack.c.h.b16 %v1852
    %v2146 = vunpack.c.l.b16 %v1853
    %v2147 = vunpack.c.h.b16 %v1853
    %v2148 = vunpack.c.l.b16 %v1854
    %v2149 = vunpack.c.h.b16 %v1854
    %v2150 = vunpack.c.l.b16 %v1855
    %v2151 = vunpack.c.h.b16 %v1855
    %v2152 = vunpack.c.l.b16 %v1856
    %v2153 = vunpack.c.h.b16 %v1856
    %v2154 = vunpack.c.l.b16 %v1857
    %v2155 = vunpack.c.h.b16 %v1857
    %v2156 = vunpack.c.l.b16 %v1858
    %v2157 = vunpack.c.h.b16 %v1858
    %v2158 = vunpack.c.l.b16 %v1859
    %v2159 = vunpack.c.h.b16 %v1859
    %v2160 = vunpack.c.l.b16 %v1860
    %v2161 = vunpack.c.h.b16 %v1860
    %v2162 = vunpack.c.l.b16 %v1861
    %v2163 = vunpack.c.h.b16 %v1861
    %v2164 = vunpack.c.l.b16 %v1862
    %v2165 = vunpack.c.h.b16 %v1862
    %v2166 = vunpack.c.l.b16 %v1863
    %v2167 = vunpack.c.h.b16 %v1863
    %v2168 = vunpack.c.l.b16 %v1864
    %v2169 = vunpack.c.h.b16 %v1864
    %v2170 = vunpack.c.l.b16 %v1865
    %v2171 = vunpack.c.h.b16 %v1865
    %v2172 = vunpack.c.l.b16 %v1866
    %v2173 = vunpack.c.h.b16 %v1866
    %v2174 = vunpack.c.l.b16 %v1867
    %v2175 = vunpack.c.h.b16 %v1867
    %v2176 = vunpack.c.l.b16 %v1868
    %v2177 = vunpack.c.h.b16 %v1868
    %v2178 = vunpack.c.l.b16 %v1869
    %v2179 = vunpack.c.h.b16 %v1869
    %v2180 = vunpack.c.l.b16 %v1870
    %v2181 = vunpack.c.h.b16 %v1870
    %v2182 = vunpack.c.l.b16 %v1871
    %v2183 = vunpack.c.h.b16 %v1871
    %v2184 = vunpack.c.l.b16 %v1872
    %v2185 = vunpack.c.h.b16 %v1872
    %v2186 = vunpack.c.l.b16 %v1873
    %v2187 = vunpack.c.h.b16 %v1873
    %v2188 = vunpack.c.l.b16 %v1874
    %v2189 = vunpack.c.h.b16 %v1874
    %v2190 = vunpack.c.l.b16 %v1875
    %v2191 = vunpack.c.h.b16 %v1875
    %v2192 = vunpack.c.l.b16 %v1876
    %v2193 = vunpack.c.h.b16 %v1876
    %v2194 = vunpack.c.l.b16 %v1877
    %v2195 = vunpack.c.h.b16 %v1877
    %v2196 = vunpack.c.l.b16 %v1878
    %v2197 = vunpack.c.h.b16 %v1878
    %v2198 = vunpack.c.l.b16 %v1879
    %v2199 = vunpack.c.h.b16 %v1879
    %v2200 = vunpack.c.l.b16 %v1880
    %v2201 = vunpack.c.h.b16 %v1880
    %v2202 = vunpack.c.l.b16 %v1881
    %v2203 = vunpack.c.h.b16 %v1881
    %v2204 = vunpack.c.l.b16 %v1882
    %v2205 = vunpack.c.h.b16 %v1882
    %v2206 = vunpack.c.l.b16 %v1883
    %v2207 = vunpack.c.h.b16 %v1883
    %v2208 = vunpack.c.l.b16 %v1884
    %v2209 = vunpack.c.h.b16 %v1884
    %v2210 = vunpack.c.l.b16 %v1885
    %v2211 = vunpack.c.h.b16 %v1885
    %v2212 = vunpack.c.l.b16 %v1886
    %v2213 = vunpack.c.h.b16 %v1886
    %v2214 = vunpack.c.l.b16 %v1887
    %v2215 = vunpack.c.h.b16 %v1887
    %v2216 = vunpack.c.l.b16 %v1888
    %v2217 = vunpack.c.h.b16 %v1888
    %v2218 = vunpack.c.l.b16 %v1889
    %v2219 = vunpack.c.h.b16 %v1889
    %v2220 = vunpack.c.l.b16 %v1890
    %v2221 = vunpack.c.h.b16 %v1890
    %v2222 = vunpack.c.l.b16 %v1891
    %v2223 = vunpack.c.h.b16 %v1891
    %v2224 = vunpack.c.l.b16 %v1892
    %v2225 = vunpack.c.h.b16 %v1892
    %v2226 = vunpack.c.l.b16 %v1893
    %v2227 = vunpack.c.h.b16 %v1893
    %v2228 = vunpack.c.l.b16 %v1894
    %v2229 = vunpack.c.h.b16 %v1894
    %v2230 = vunpack.c.l.b16 %v1895
    %v2231 = vunpack.c.h.b16 %v1895
    %v2232 = vunpack.c.l.b16 %v1896
    %v2233 = vunpack.c.h.b16 %v1896
    %v2234 = vunpack.c.l.b16 %v1897
    %v2235 = vunpack.c.h.b16 %v1897
    %v2236 = vunpack.c.l.b16 %v1898
    %v2237 = vunpack.c.h.b16 %v1898
    %v2238 = vunpack.c.l.b16 %v1899
    %v2239 = vunpack.c.h.b16 %v1899
    %v2240 = vunpack.c.l.b16 %v1900
    %v2241 = vunpack.c.h.b16 %v1900
    %v2242 = vunpack.c.l.b16 %v1901
    %v2243 = vunpack.c.h.b16 %v1901
    %v2244 = vunpack.c.l.b16 %v1902
    %v2245 = vunpack.c.h.b16 %v1902
    %v2246 = vunpack.c.l.b16 %v1903
    %v2247 = vunpack.c.h.b16 %v1903
    %v2248 = vunpack.c.l.b16 %v1904
    %v2249 = vunpack.c.h.b16 %v1904
    %v2250 = vunpack.c.l.b16 %v1905
    %v2251 = vunpack.c.h.b16 %v1905
    %v2252 = vunpack.c.l.b16 %v1906
    %v2253 = vunpack.c.h.b16 %v1906
    %v2254 = vunpack.c.l.b16 %v1907
    %v2255 = vunpack.c.h.b16 %v1907
    %v2256 = vunpack.c.l.b16 %v1908
    %v2257 = vunpack.c.h.b16 %v1908
    %v2258 = vunpack.c.l.b16 %v1909
    %v2259 = vunpack.c.h.b16 %v1909
    %v2260 = vunpack.c.l.b16 %v1910
    %v2261 = vunpack.c.h.b16 %v1910
    %v2262 = vunpack.c.l.b16 %v1911
    %v2263 = vunpack.c.h.b16 %v1911
    %v2264 = vunpack.c.l.b16 %v1912
    %v2265 = vunpack.c.h.b16 %v1912
    %v2266 = vunpack.c.l.b16 %v1913
    %v2267 = vunpack.c.h.b16 %v1913
    %v2268 = vunpack.c.l.b16 %v1914
    %v2269 = vunpack.c.h.b16 %v1914
    %v2270 = vunpack.c.l.b16 %v1915
    %v2271 = vunpack.c.h.b16 %v1915
    %v2272 = vunpack.c.l.b16 %v1916
    %v2273 = vunpack.c.h.b16 %v1916
    %v2274 = vunpack.c.l.b16 %v1917
    %v2275 = vunpack.c.h.b16 %v1917
    %v2276 = vunpack.c.l.b16 %v1918
    %v2277 = vunpack.c.h.b16 %v1918
    %v2278 = vunpack.c.l.b16 %v1919
    %v2279 = vunpack.c.h.b16 %v1919
    %v2280 = vunpack.c.l.b16 %v1920
    %v2281 = vunpack.c.h.b16 %v1920
    %v2282 = vunpack.c.l.b16 %v1921
    %v2283 = vunpack.c.h.b16 %v1921
    %v2284 = vunpack.c.l.b16 %v1922
    %v2285 = vunpack.c.h.b16 %v1922
    %v2286 = vunpack.c.l.b16 %v1923
    %v2287 = vunpack.c.h.b16 %v1923
    %v2288 = vunpack.c.l.b16 %v1924
    %v2289 = vunpack.c.h.b16 %v1924
    %v2290 = vunpack.c.l.b16 %v1925
    %v2291 = vunpack.c.h.b16 %v1925
    %v2292 = vunpack.c.l.b16 %v1926
    %v2293 = vunpack.c.h.b16 %v1926
    %v2294 = vunpack.c.l.b16 %v1927
    %v2295 = vunpack.c.h.b16 %v1927
    %v2296 = vunpack.c.l.b16 %v1928
    %v2297 = vunpack.c.h.b16 %v1928
    %v2298 = vunpack.c.l.b16 %v1929
    %v2299 = vunpack.c.h.b16 %v1929
    %v2300 = vunpack.c.l.b16 %v1930
    %v2301 = vunpack.c.h.b16 %v1930
    %v2302 = vunpack.c.l.b16 %v1931
    %v2303 = vunpack.c.h.b16 %v1931
    %v2304 = vunpack.c.l.b16 %v1932
    %v2305 = vunpack.c.h.b16 %v1932
    %v2306 = vunpack.c.l.b16 %v1933
    %v2307 = vunpack.c.h.b16 %v1933
    %v2308 = vunpack.c.l.b16 %v1934
    %v2309 = vunpack.c.h.b16 %v1934
    %v2310 = vunpack.c.l.b16 %v1935
    %v2311 = vunpack.c.h.b16 %v1935
    %v2312 = vunpack.c.l.b16 %v1936
    %v2313 = vunpack.c.h.b16 %v1936
    %v2314 = vunpack.c.l.b16 %v1937
    %v2315 = vunpack.c.h.b16 %v1937
    %v2316 = vunpack.c.l.b16 %v1938
    %v2317 = vunpack.c.h.b16 %v1938
    %v2318 = vunpack.c.l.b16 %v1939
    %v2319 = vunpack.c.h.b16 %v1939
    %v2320 = vunpack.c.l.b16 %v1940
    %v2321 = vunpack.c.h.b16 %v1940
    %v2322 = vunpack.c.l.b16 %v1941
    %v2323 = vunpack.c.h.b16 %v1941
    %v2324 = vunpack.c.l.b16 %v1942
    %v2325 = vunpack.c.h.b16 %v1942
    %v2326 = vunpack.c.l.b16 %v1943
    %v2327 = vunpack.c.h.b16 %v1943
    %v2328 = vpack.c.b16 %v2074, %v2072
    %v2329 = vpack.c.b16 %v2075, %v2073
    %v2330 = vpack.c.b16 %v2078, %v2076
    %v2331 = vpack.c.b16 %v2079, %v2077
    %v2332 = vpack.c.b16 %v2082, %v2080
    %v2333 = vpack.c.b16 %v2083, %v2081
    %v2334 = vpack.c.b16 %v2086, %v2084
    %v2335 = vpack.c.b16 %v2087, %v2085
    %v2336 = vpack.c.b16 %v2090, %v2088
    %v2337 = vpack.c.b16 %v2091, %v2089
    %v2338 = vpack.c.b16 %v2094, %v2092
    %v2339 = vpack.c.b16 %v2095, %v2093
    %v2340 = vpack.c.b16 %v2098, %v2096
    %v2341 = vpack.c.b16 %v2099, %v2097
    %v2342 = vpack.c.b16 %v2102, %v2100
    %v2343 = vpack.c.b16 %v2103, %v2101
    %v2344 = vpack.c.b16 %v2106, %v2104
    %v2345 = vpack.c.b16 %v2107, %v2105
    %v2346 = vpack.c.b16 %v2110, %v2108
    %v2347 = vpack.c.b16 %v2111, %v2109
    %v2348 = vpack.c.b16 %v2114, %v2112
    %v2349 = vpack.c.b16 %v2115, %v2113
    %v2350 = vpack.c.b16 %v2118, %v2116
    %v2351 = vpack.c.b16 %v2119, %v2117
    %v2352 = vpack.c.b16 %v2122, %v2120
    %v2353 = vpack.c.b16 %v2123, %v2121
    %v2354 = vpack.c.b16 %v2126, %v2124
    %v2355 = vpack.c.b16 %v2127, %v2125
    %v2356 = vpack.c.b16 %v2130, %v2128
    %v2357 = vpack.c.b16 %v2131, %v2129
    %v2358 = vpack.c.b16 %v2134, %v2132
    %v2359 = vpack.c.b16 %v2135, %v2133
    %v2360 = vpack.c.b16 %v2138, %v2136
    %v2361 = vpack.c.b16 %v2139, %v2137
    %v2362 = vpack.c.b16 %v2142, %v2140
    %v2363 = vpack.c.b16 %v2143, %v2141
    %v2364 = vpack.c.b16 %v2146, %v2144
    %v2365 = vpack.c.b16 %v2147, %v2145
    %v2366 = vpack.c.b16 %v2150, %v2148
    %v2367 = vpack.c.b16 %v2151, %v2149
    %v2368 = vpack.c.b16 %v2154, %v2152
    %v2369 = vpack.c.b16 %v2155, %v2153
    %v2370 = vpack.c.b16 %v2158, %v2156
    %v2371 = vpack.c.b16 %v2159, %v2157
    %v2372 = vpack.c.b16 %v2162, %v2160
    %v2373 = vpack.c.b16 %v2163, %v2161
    %v2374 = vpack.c.b16 %v2166, %v2164
    %v2375 = vpack.c.b16 %v2167, %v2165
    %v2376 = vpack.c.b16 %v2170, %v2168
    %v2377 = vpack.c.b16 %v2171, %v2169
    %v2378 = vpack.c.b16 %v2174, %v2172
    %v2379 = vpack.c.b16 %v2175, %v2173
    %v2380 = vpack.c.b16 %v2178, %v2176
    %v2381 = vpack.c.b16 %v2179, %v2177
    %v2382 = vpack.c.b16 %v2182, %v2180
    %v2383 = vpack.c.b16 %v2183, %v2181
    %v2384 = vpack.c.b16 %v2186, %v2184
    %v2385 = vpack.c.b16 %v2187, %v2185
    %v2386 = vpack.c.b16 %v2190, %v2188
    %v2387 = vpack.c.b16 %v2191, %v2189
    %v2388 = vpack.c.b16 %v2194, %v2192
    %v2389 = vpack.c.b16 %v2195, %v2193
    %v2390 = vpack.c.b16 %v2198, %v2196
    %v2391 = vpack.c.b16 %v2199, %v2197
    %v2392 = vpack.c.b16 %v2202, %v2200
    %v2393 = vpack.c.b16 %v2203, %v2201
    %v2394 = vpack.c.b16 %v2206, %v2204
    %v2395 = vpack.c.b16 %v2207, %v2205
    %v2396 = vpack.c.b16 %v2210, %v2208
    %v2397 = vpack.c.b16 %v2211, %v2209
    %v2398 = vpack.c.b16 %v2214, %v2212
    %v2399 = vpack.c.b16 %v2215, %v2213
    %v2400 = vpack.c.b16 %v2218, %v2216
    %v2401 = vpack.c.b16 %v2219, %v2217
    %v2402 = vpack.c.b16 %v2222, %v2220
    %v2403 = vpack.c.b16 %v2223, %v2221
    %v2404 = vpack.c.b16 %v2226, %v2224
    %v2405 = vpack.c.b16 %v2227, %v2225
    %v2406 = vpack.c.b16 %v2230, %v2228
    %v2407 = vpack.c.b16 %v2231, %v2229
    %v2408 = vpack.c.b16 %v2234, %v2232
    %v2409 = vpack.c.b16 %v2235, %v2233
    %v2410 = vpack.c.b16 %v2238, %v2236
    %v2411 = vpack.c.b16 %v2239, %v2237
    %v2412 = vpack.c.b16 %v2242, %v2240
    %v2413 = vpack.c.b16 %v2243, %v2241
    %v2414 = vpack.c.b16 %v2246, %v2244
    %v2415 = vpack.c.b16 %v2247, %v2245
    %v2416 = vpack.c.b16 %v2250, %v2248
    %v2417 = vpack.c.b16 %v2251, %v2249
    %v2418 = vpack.c.b16 %v2254, %v2252
    %v2419 = vpack.c.b16 %v2255, %v2253
    %v2420 = vpack.c.b16 %v2258, %v2256
    %v2421 = vpack.c.b16 %v2259, %v2257
    %v2422 = vpack.c.b16 %v2262, %v2260
    %v2423 = vpack.c.b16 %v2263, %v2261
    %v2424 = vpack.c.b16 %v2266, %v2264
    %v2425 = vpack.c.b16 %v2267, %v2265
    %v2426 = vpack.c.b16 %v2270, %v2268
    %v2427 = vpack.c.b16 %v2271, %v2269
    %v2428 = vpack.c.b16 %v2274, %v2272
    %v2429 = vpack.c.b16 %v2275, %v2273
    %v2430 = vpack.c.b16 %v2278, %v2276
    %v2431 = vpack.c.b16 %v2279, %v2277
    %v2432 = vpack.c.b16 %v2282, %v2280
    %v2433 = vpack.c.b16 %v2283, %v2281
    %v2434 = vpack.c.b16 %v2286, %v2284
    %v2435 = vpack.c.b16 %v2287, %v2285
    %v2436 = vpack.c.b16 %v2290, %v2288
    %v2437 = vpack.c.b16 %v2291, %v2289
    %v2438 = vpack.c.b16 %v2294, %v2292
    %v2439 = vpack.c.b16 %v2295, %v2293
    %v2440 = vpack.c.b16 %v2298, %v2296
    %v2441 = vpack.c.b16 %v2299, %v2297
    %v2442 = vpack.c.b16 %v2302, %v2300
    %v2443 = vpack.c.b16 %v2303, %v2301
    %v2444 = vpack.c.b16 %v2306, %v2304
    %v2445 = vpack.c.b16 %v2307, %v2305
    %v2446 = vpack.c.b16 %v2310, %v2308
    %v2447 = vpack.c.b16 %v2311, %v2309
    %v2448 = vpack.c.b16 %v2314, %v2312
    %v2449 = vpack.c.b16 %v2315, %v2313
    %v2450 = vpack.c.b16 %v2318, %v2316
    %v2451 = vpack.c.b16 %v2319, %v2317
    %v2452 = vpack.c.b16 %v2322, %v2320
    %v2453 = vpack.c.b16 %v2323, %v2321
    %v2454 = vpack.c.b16 %v2326, %v2324
    %v2455 = vpack.c.b16 %v2327, %v2325
    %2584 = vmatpush.bf16.msra.mxu0 %v2342
    %2585 = vmatpush.bf16.msra.mxu0 %v2340
    %2586 = vmatpush.bf16.msra.mxu0 %v2338
    %2587 = vmatpush.bf16.msra.mxu0 %v2336
    %2588 = vmatpush.bf16.msra.mxu0 %v2334
    %2589 = vmatpush.bf16.msra.mxu0 %v2332
    %2590 = vmatpush.bf16.msra.mxu0 %v2330
    %2591 = vmatpush.bf16.msra.mxu0 %v2328
    %2592 = vmatmul.bf16.gmra.mxu0 %v1808
    %v2593 = vpop.f32.mrf.mxu0
    %v2594 = vadd.f32 0.0, %v2593
    %v2595 = vpop.f32.mrf.mxu0
    %v2596 = vadd.f32 0.0, %v2595
    %2597 = vdwg.mxu0
    %2598 = vmatpush.bf16.msra.mxu0 %v2358
    %2599 = vmatpush.bf16.msra.mxu0 %v2356
    %2600 = vmatpush.bf16.msra.mxu0 %v2354
    %2601 = vmatpush.bf16.msra.mxu0 %v2352
    %2602 = vmatpush.bf16.msra.mxu0 %v2350
    %2603 = vmatpush.bf16.msra.mxu0 %v2348
    %2604 = vmatpush.bf16.msra.mxu0 %v2346
    %2605 = vmatpush.bf16.msra.mxu0 %v2344
    %2606 = vmatmul.bf16.gmra.mxu0 %v1809
    %v2607 = vpop.f32.mrf.mxu0
    %v2608 = vadd.f32 %v2594, %v2607
    %v2609 = vpop.f32.mrf.mxu0
    %v2610 = vadd.f32 %v2596, %v2609
    %2611 = vdwg.mxu0
    %2612 = vmatpush.bf16.msra.mxu0 %v2374
    %2613 = vmatpush.bf16.msra.mxu0 %v2372
    %2614 = vmatpush.bf16.msra.mxu0 %v2370
    %2615 = vmatpush.bf16.msra.mxu0 %v2368
    %2616 = vmatpush.bf16.msra.mxu0 %v2366
    %2617 = vmatpush.bf16.msra.mxu0 %v2364
    %2618 = vmatpush.bf16.msra.mxu0 %v2362
    %2619 = vmatpush.bf16.msra.mxu0 %v2360
    %2620 = vmatmul.bf16.gmra.mxu0 %v1810
    %v2621 = vpop.f32.mrf.mxu0
    %v2622 = vadd.f32 %v2608, %v2621
    %v2623 = vpop.f32.mrf.mxu0
    %v2624 = vadd.f32 %v2610, %v2623
    %2625 = vdwg.mxu0
    %2626 = vmatpush.bf16.msra.mxu0 %v2390
    %2627 = vmatpush.bf16.msra.mxu0 %v2388
    %2628 = vmatpush.bf16.msra.mxu0 %v2386
    %2629 = vmatpush.bf16.msra.mxu0 %v2384
    %2630 = vmatpush.bf16.msra.mxu0 %v2382
    %2631 = vmatpush.bf16.msra.mxu0 %v2380
    %2632 = vmatpush.bf16.msra.mxu0 %v2378
    %2633 = vmatpush.bf16.msra.mxu0 %v2376
    %2634 = vmatmul.bf16.gmra.mxu0 %v1811
    %v2635 = vpop.f32.mrf.mxu0
    %v2636 = vadd.f32 %v2622, %v2635
    %v2637 = vpop.f32.mrf.mxu0
    %v2638 = vadd.f32 %v2624, %v2637
    %2639 = vdwg.mxu0
    %2640 = vmatpush.bf16.msra.mxu0 %v2406
    %2641 = vmatpush.bf16.msra.mxu0 %v2404
    %2642 = vmatpush.bf16.msra.mxu0 %v2402
    %2643 = vmatpush.bf16.msra.mxu0 %v2400
    %2644 = vmatpush.bf16.msra.mxu0 %v2398
    %2645 = vmatpush.bf16.msra.mxu0 %v2396
    %2646 = vmatpush.bf16.msra.mxu0 %v2394
    %2647 = vmatpush.bf16.msra.mxu0 %v2392
    %2648 = vmatmul.bf16.gmra.mxu0 %v1812
    %v2649 = vpop.f32.mrf.mxu0
    %v2650 = vadd.f32 %v2636, %v2649
    %v2651 = vpop.f32.mrf.mxu0
    %v2652 = vadd.f32 %v2638, %v2651
    %2653 = vdwg.mxu0
    %2654 = vmatpush.bf16.msra.mxu0 %v2422
    %2655 = vmatpush.bf16.msra.mxu0 %v2420
    %2656 = vmatpush.bf16.msra.mxu0 %v2418
    %2657 = vmatpush.bf16.msra.mxu0 %v2416
    %2658 = vmatpush.bf16.msra.mxu0 %v2414
    %2659 = vmatpush.bf16.msra.mxu0 %v2412
    %2660 = vmatpush.bf16.msra.mxu0 %v2410
    %2661 = vmatpush.bf16.msra.mxu0 %v2408
    %2662 = vmatmul.bf16.gmra.mxu0 %v1813
    %v2663 = vpop.f32.mrf.mxu0
    %v2664 = vadd.f32 %v2650, %v2663
    %v2665 = vpop.f32.mrf.mxu0
    %v2666 = vadd.f32 %v2652, %v2665
    %2667 = vdwg.mxu0
    %2668 = vmatpush.bf16.msra.mxu0 %v2438
    %2669 = vmatpush.bf16.msra.mxu0 %v2436
    %2670 = vmatpush.bf16.msra.mxu0 %v2434
    %2671 = vmatpush.bf16.msra.mxu0 %v2432
    %2672 = vmatpush.bf16.msra.mxu0 %v2430
    %2673 = vmatpush.bf16.msra.mxu0 %v2428
    %2674 = vmatpush.bf16.msra.mxu0 %v2426
    %2675 = vmatpush.bf16.msra.mxu0 %v2424
    %2676 = vmatmul.bf16.gmra.mxu0 %v1814
    %v2677 = vpop.f32.mrf.mxu0
    %v2678 = vadd.f32 %v2664, %v2677
    %v2679 = vpop.f32.mrf.mxu0
    %v2680 = vadd.f32 %v2666, %v2679
    %2681 = vdwg.mxu0
    %2682 = vmatpush.bf16.msra.mxu0 %v2454
    %2683 = vmatpush.bf16.msra.mxu0 %v2452
    %2684 = vmatpush.bf16.msra.mxu0 %v2450
    %2685 = vmatpush.bf16.msra.mxu0 %v2448
    %2686 = vmatpush.bf16.msra.mxu0 %v2446
    %2687 = vmatpush.bf16.msra.mxu0 %v2444
    %2688 = vmatpush.bf16.msra.mxu0 %v2442
    %2689 = vmatpush.bf16.msra.mxu0 %v2440
    %2690 = vmatmul.bf16.gmra.mxu0 %v1815
    %v2691 = vpop.f32.mrf.mxu0
    %v2692 = vadd.f32 %v2678, %v2691
    %v2693 = vpop.f32.mrf.mxu0
    %v2694 = vadd.f32 %v2680, %v2693
    %2695 = vdwg.mxu0
    %2696 = vmatpush.bf16.msra.mxu0 %v2343
    %2697 = vmatpush.bf16.msra.mxu0 %v2341
    %2698 = vmatpush.bf16.msra.mxu0 %v2339
    %2699 = vmatpush.bf16.msra.mxu0 %v2337
    %2700 = vmatpush.bf16.msra.mxu0 %v2335
    %2701 = vmatpush.bf16.msra.mxu0 %v2333
    %2702 = vmatpush.bf16.msra.mxu0 %v2331
    %2703 = vmatpush.bf16.msra.mxu0 %v2329
    %2704 = vmatmul.bf16.gmra.mxu0 %v1808
    %v2705 = vpop.f32.mrf.mxu0
    %v2706 = vadd.f32 0.0, %v2705
    %v2707 = vpop.f32.mrf.mxu0
    %v2708 = vadd.f32 0.0, %v2707
    %2709 = vdwg.mxu0
    %2710 = vmatpush.bf16.msra.mxu0 %v2359
    %2711 = vmatpush.bf16.msra.mxu0 %v2357
    %2712 = vmatpush.bf16.msra.mxu0 %v2355
    %2713 = vmatpush.bf16.msra.mxu0 %v2353
    %2714 = vmatpush.bf16.msra.mxu0 %v2351
    %2715 = vmatpush.bf16.msra.mxu0 %v2349
    %2716 = vmatpush.bf16.msra.mxu0 %v2347
    %2717 = vmatpush.bf16.msra.mxu0 %v2345
    %2718 = vmatmul.bf16.gmra.mxu0 %v1809
    %v2719 = vpop.f32.mrf.mxu0
    %v2720 = vadd.f32 %v2706, %v2719
    %v2721 = vpop.f32.mrf.mxu0
    %v2722 = vadd.f32 %v2708, %v2721
    %2723 = vdwg.mxu0
    %2724 = vmatpush.bf16.msra.mxu0 %v2375
    %2725 = vmatpush.bf16.msra.mxu0 %v2373
    %2726 = vmatpush.bf16.msra.mxu0 %v2371
    %2727 = vmatpush.bf16.msra.mxu0 %v2369
    %2728 = vmatpush.bf16.msra.mxu0 %v2367
    %2729 = vmatpush.bf16.msra.mxu0 %v2365
    %2730 = vmatpush.bf16.msra.mxu0 %v2363
    %2731 = vmatpush.bf16.msra.mxu0 %v2361
    %2732 = vmatmul.bf16.gmra.mxu0 %v1810
    %v2733 = vpop.f32.mrf.mxu0
    %v2734 = vadd.f32 %v2720, %v2733
    %v2735 = vpop.f32.mrf.mxu0
    %v2736 = vadd.f32 %v2722, %v2735
    %2737 = vdwg.mxu0
    %2738 = vmatpush.bf16.msra.mxu0 %v2391
    %2739 = vmatpush.bf16.msra.mxu0 %v2389
    %2740 = vmatpush.bf16.msra.mxu0 %v2387
    %2741 = vmatpush.bf16.msra.mxu0 %v2385
    %2742 = vmatpush.bf16.msra.mxu0 %v2383
    %2743 = vmatpush.bf16.msra.mxu0 %v2381
    %2744 = vmatpush.bf16.msra.mxu0 %v2379
    %2745 = vmatpush.bf16.msra.mxu0 %v2377
    %2746 = vmatmul.bf16.gmra.mxu0 %v1811
    %v2747 = vpop.f32.mrf.mxu0
    %v2748 = vadd.f32 %v2734, %v2747
    %v2749 = vpop.f32.mrf.mxu0
    %v2750 = vadd.f32 %v2736, %v2749
    %2751 = vdwg.mxu0
    %2752 = vmatpush.bf16.msra.mxu0 %v2407
    %2753 = vmatpush.bf16.msra.mxu0 %v2405
    %2754 = vmatpush.bf16.msra.mxu0 %v2403
    %2755 = vmatpush.bf16.msra.mxu0 %v2401
    %2756 = vmatpush.bf16.msra.mxu0 %v2399
    %2757 = vmatpush.bf16.msra.mxu0 %v2397
    %2758 = vmatpush.bf16.msra.mxu0 %v2395
    %2759 = vmatpush.bf16.msra.mxu0 %v2393
    %2760 = vmatmul.bf16.gmra.mxu0 %v1812
    %v2761 = vpop.f32.mrf.mxu0
    %v2762 = vadd.f32 %v2748, %v2761
    %v2763 = vpop.f32.mrf.mxu0
    %v2764 = vadd.f32 %v2750, %v2763
    %2765 = vdwg.mxu0
    %2766 = vmatpush.bf16.msra.mxu0 %v2423
    %2767 = vmatpush.bf16.msra.mxu0 %v2421
    %2768 = vmatpush.bf16.msra.mxu0 %v2419
    %2769 = vmatpush.bf16.msra.mxu0 %v2417
    %2770 = vmatpush.bf16.msra.mxu0 %v2415
    %2771 = vmatpush.bf16.msra.mxu0 %v2413
    %2772 = vmatpush.bf16.msra.mxu0 %v2411
    %2773 = vmatpush.bf16.msra.mxu0 %v2409
    %2774 = vmatmul.bf16.gmra.mxu0 %v1813
    %v2775 = vpop.f32.mrf.mxu0
    %v2776 = vadd.f32 %v2762, %v2775
    %v2777 = vpop.f32.mrf.mxu0
    %v2778 = vadd.f32 %v2764, %v2777
    %2779 = vdwg.mxu0
    %2780 = vmatpush.bf16.msra.mxu0 %v2439
    %2781 = vmatpush.bf16.msra.mxu0 %v2437
    %2782 = vmatpush.bf16.msra.mxu0 %v2435
    %2783 = vmatpush.bf16.msra.mxu0 %v2433
    %2784 = vmatpush.bf16.msra.mxu0 %v2431
    %2785 = vmatpush.bf16.msra.mxu0 %v2429
    %2786 = vmatpush.bf16.msra.mxu0 %v2427
    %2787 = vmatpush.bf16.msra.mxu0 %v2425
    %2788 = vmatmul.bf16.gmra.mxu0 %v1814
    %v2789 = vpop.f32.mrf.mxu0
    %v2790 = vadd.f32 %v2776, %v2789
    %v2791 = vpop.f32.mrf.mxu0
    %v2792 = vadd.f32 %v2778, %v2791
    %2793 = vdwg.mxu0
    %2794 = vmatpush.bf16.msra.mxu0 %v2455
    %2795 = vmatpush.bf16.msra.mxu0 %v2453
    %2796 = vmatpush.bf16.msra.mxu0 %v2451
    %2797 = vmatpush.bf16.msra.mxu0 %v2449
    %2798 = vmatpush.bf16.msra.mxu0 %v2447
    %2799 = vmatpush.bf16.msra.mxu0 %v2445
    %2800 = vmatpush.bf16.msra.mxu0 %v2443
    %2801 = vmatpush.bf16.msra.mxu0 %v2441
    %2802 = vmatmul.bf16.gmra.mxu0 %v1815
    %v2803 = vpop.f32.mrf.mxu0
    %v2804 = vadd.f32 %v2790, %v2803
    %v2805 = vpop.f32.mrf.mxu0
    %v2806 = vadd.f32 %v2792, %v2805
    %2807 = vdwg.mxu0
    %p2808 = scmp.eq.s32.totalorder 0, 0
    // Predicated region
    $region38: #{tpu_custom_call.1} parent=1 // pred_check
      %p2809 = pneg %p2808
    $region39: #{tpu_custom_call.1} parent=1 // pred_check_branch
      %2811 = sbr.rel (%p2809) target = $region41
    $region40: #{tpu_custom_call.1} parent=1 // pred_region
      %2812 = vst [vmem:[#allocation2] sm:$0xff] %v2692
      %2813 = vst [vmem:[#allocation2 + $0x8] sm:$0xff] %v2804
      %2814 = vst [vmem:[#allocation2 + $0x10] sm:$0xff] %v2694
      %2815 = vst [vmem:[#allocation2 + $0x18] sm:$0xff] %v2806
    $region41: #{tpu_custom_call.1} parent=1 // pred_fallthru
      _
    %p2816 = scmp.gt.s32.totalorder 0, 0
    // Predicated region
    $region42: #{tpu_custom_call.1} parent=1 // pred_check
      %p2817 = pneg %p2816
    $region43: #{tpu_custom_call.1} parent=1 // pred_check_branch
      %2819 = sbr.rel (%p2817) target = $region45
    $region44: #{tpu_custom_call.1} parent=1 // pred_region
      %v2820 = vld [vmem:[#allocation2] sm:$0xff]
      %v2821 = vld [vmem:[#allocation2 + $0x8] sm:$0xff]
      %v2822 = vld [vmem:[#allocation2 + $0x10] sm:$0xff]
      %v2823 = vld [vmem:[#allocation2 + $0x18] sm:$0xff]
      %v2824 = vadd.f32 %v2820, %v2692
      %v2825 = vadd.f32 %v2821, %v2804
      %v2826 = vadd.f32 %v2822, %v2694
      %v2827 = vadd.f32 %v2823, %v2806
      %2828 = vst [vmem:[#allocation2] sm:$0xff] %v2824
      %2829 = vst [vmem:[#allocation2 + $0x8] sm:$0xff] %v2825
      %2830 = vst [vmem:[#allocation2 + $0x10] sm:$0xff] %v2826
      %2831 = vst [vmem:[#allocation2 + $0x18] sm:$0xff] %v2827
    $region45: #{tpu_custom_call.1} parent=1 // pred_fallthru
      _
    // Predicated region
    $region46: #{tpu_custom_call.1} parent=1 // pred_check
      %p2832 = pneg %p2808
    $region47: #{tpu_custom_call.1} parent=1 // pred_check_branch
      %2834 = sbr.rel (%p2832) target = $region49
    $region48: #{tpu_custom_call.1} parent=1 // pred_region
      %v2835 = vld [vmem:[#allocation2] sm:$0xff]
      %v2836 = vld [vmem:[#allocation2 + $0x8] sm:$0xff]
      %v2837 = vld [vmem:[#allocation2 + $0x10] sm:$0xff]
      %v2838 = vld [vmem:[#allocation2 + $0x18] sm:$0xff]
      %v2839 = vld [vmem:[%s4] sm:$0x3]
      %v2841 = vperm.slane %v2839, 0
      %v2842 = vperm.slane %v2839, 1
      %v2845 = vadd.f32 %v2835, %v2841
      %v2846 = vadd.f32 %v2836, %v2842
      %v2847 = vadd.f32 %v2837, %v2841
      %v2848 = vadd.f32 %v2838, %v2842
      %2849 = vst [vmem:[#allocation11] sm:$0xff] %v2845
      %2850 = vst [vmem:[#allocation11 + $0x8] sm:$0xff] %v2846
      %2851 = vst [vmem:[#allocation11 + $0x10] sm:$0xff] %v2847
      %2852 = vst [vmem:[#allocation11 + $0x18] sm:$0xff] %v2848
    $region49: #{tpu_custom_call.1} parent=1 // pred_fallthru
      _
    // Predicated region
    $region50: #{tpu_custom_call.1} parent=1 // pred_check
      _
    $region51: #{tpu_custom_call.1} parent=1 // pred_check_branch
      %2854 = sbr.rel (0) target = $region53
    $region52: #{tpu_custom_call.1} parent=1 // pred_region
      %2856 = vsyncadd [#allocation5], 0
      %s2857 = sshll.u32 [#allocation11], 4
      %s2858 = int_to_ptr.vmem [resolvable:$true] %s2857
      %s2859 = sshll.u32 %s5, 4
      %s2860 = int_to_ptr.hbm [resolvable:$true] %s2859
      %2865 = dma.vmem_to_hbm [thread:$0]  %s2858, 512, %s2860, [#allocation5], 256, 256, 16
    $region53: #{tpu_custom_call.1} parent=1 // pred_fallthru
      _
    // Predicated region
    $region54: #{tpu_custom_call.1} parent=1 // pred_check
      _
    $region55: #{tpu_custom_call.1} parent=1 // pred_check_branch
      %2867 = sbr.rel (0) target = $region57
    $region56: #{tpu_custom_call.1} parent=1 // pred_region
      %2869 = dma.done [#allocation5], 512
    $region57: #{tpu_custom_call.1} parent=1 // pred_fallthru
      _
    %2870 = vsyncpa [#allocation4], 1
    %2871 = vsyncpa [#allocation7], 1
    %2872 = vsyncpa [#allocation10], 1
    %2873 = vsyncpa [#allocation5], 1

</llo_original>
